<compile_context>
chip_gen: v5e
topology: v5e:2x2
jax: 0.10.0
libtpu: 0.0.40
codegen_flags: <defaults>
</compile_context>

<pallas_src>
import functools

import jax
import jax.numpy as jnp
from jax.experimental import pallas as pl
from jax.experimental.pallas import tpu as pltpu

LEAKY_SLOPE = 0.1   # TODO(synk): YOLO "Convolutional" assumed BN + LeakyReLU(0.1); adjust if the repo's block differs.
BN_EPS = 1e-5


# --------------------------------------------------------------------------- #
# Kernel
# --------------------------------------------------------------------------- #
def _conv_bn_lrelu_up_kernel(x_ref, w_ref, scale_ref, bias_ref, rep_ref, o_ref,
                             *, mxu_dtype, upsample_impl):
    """Fused 1x1 conv + BN(eval) + LeakyReLU + 2x nearest upsample, channels-first.

    x_ref:     (1, Cin, TH*W)        TH spatial rows of one image, NCHW-flat
    w_ref:     (Cout, Cin)           1x1 conv weight
    scale_ref: (Cout, 1)             fused BN scale = gamma / sqrt(var + eps)
    bias_ref:  (Cout, 1)             fused BN bias  = beta - mean * scale
    rep_ref:   (W, 2W)               0/1 width-repeat matrix (R[w, 2w+b] = 1)
    o_ref:     (1, Cout, 2*TH, 2*W)  output rows 2*t*TH .. 2*(t+1)*TH of (2H, 2W)
    """
    cout, _ = w_ref.shape
    ts = x_ref.shape[2]
    w_lane = rep_ref.shape[0]
    th = ts // w_lane

    x = x_ref[0]                      # (Cin, TH*W) — spatial already in lanes
    w = w_ref[...]
    if mxu_dtype is not None and x.dtype != mxu_dtype:
        x = x.astype(mxu_dtype)       # cast in vregs; HBM still carries input dtype
        w = w.astype(mxu_dtype)

    # ---- 1x1 conv as one channels-first MXU matmul: (Cout,Cin)@(Cin,TH*W) ----
    y = jnp.dot(w, x, preferred_element_type=jnp.float32)        # (Cout, TH*W) f32
    # ---- BN (eval) folded to affine + LeakyReLU on pre-upsample (1x) data ----
    y = y * scale_ref[...] + bias_ref[...]
    y = jnp.where(y > 0, y, LEAKY_SLOPE * y)

    if upsample_impl == "vector":
        # Height 2x: duplicate each W-wide row (the only remaining relayout,
        # done before the width repeat so it touches 2x rather than 4x data).
        y = y.reshape(cout, th, w_lane)
        y = jnp.broadcast_to(y[:, :, None, :], (cout, th, 2, w_lane))
        y = y.reshape(cout, 2 * th, w_lane)
        # Width 2x on the MXU (exact: every output column copies one input column;
        # kept in f32 so the duplication introduces no rounding).
        y = y.reshape(cout * 2 * th, w_lane)
        y = jnp.dot(y, rep_ref[...], preferred_element_type=jnp.float32)
        o_ref[0] = y.reshape(cout, 2 * th, 2 * w_lane).astype(o_ref.dtype)
    else:
        # Conservative fallback: per-row MXU width repeat + double store (height 2x).
        for r in range(th):
            yr = y[:, r * w_lane:(r + 1) * w_lane]                # (Cout, W)
            yw = jnp.dot(yr, rep_ref[...], preferred_element_type=jnp.float32)
            yw = yw.astype(o_ref.dtype)                           # (Cout, 2W)
            o_ref[0, :, 2 * r, :] = yw
            o_ref[0, :, 2 * r + 1, :] = yw


# --------------------------------------------------------------------------- #
# Tiling / VMEM budgeting
# --------------------------------------------------------------------------- #
def _vmem_capacity_bytes():
    try:
        info = pltpu.get_tpu_info()
        return int(getattr(info, "vmem_capacity_bytes", 64 * 2**20))
    except Exception:                 # no/odd backend info -> assume v7x-sized VMEM
        return 64 * 2**20


def _legal_rows(H, W, th):
    """th input rows per step must tile H and satisfy the (8,128) block rules."""
    if H % th:
        return False
    if th == H:                       # full-extent blocks are always legal
        return True
    return (th * W) % 128 == 0 and (2 * th) % 8 == 0


def _per_step_vmem_bytes(th, W, Cin, Cout, in_bytes, out_bytes, param_bytes):
    """Live VMEM per grid step, including f32 intermediates (review item 4)."""
    ts = th * W
    in_blk = Cin * ts * in_bytes
    out_blk = 4 * Cout * ts * out_bytes
    # f32 intermediates: conv result (1x) + duplicated rows (2x) + widened
    # result (4x) + relayout/padding slack (~1x)
    interm = 8 * Cout * ts * 4
    return 2 * in_blk + 2 * out_blk + 2 * param_bytes + interm


def _pick_rows_per_step(N, H, W, Cin, Cout, in_bytes, out_bytes, param_bytes,
                        budget_bytes):
    cands = [th for th in range(1, H + 1) if _legal_rows(H, W, th)]
    # Prefer >= 2 grid steps so both v7x TensorCores get work (review item 5).
    multi = [th for th in cands if N * (H // th) >= 2]
    pool = multi if multi else cands

    def per_step(th):
        return _per_step_vmem_bytes(th, W, Cin, Cout, in_bytes, out_bytes,
                                    param_bytes)

    fit = [th for th in pool if per_step(th) <= budget_bytes]
    if fit:
        aligned = [th for th in fit if th % 8 == 0]   # free in-kernel sublane splits
        th = max(aligned) if aligned else max(fit)
    else:
        th = min(pool)               # smallest shape-legal tile; limit auto-raised
    return th, per_step(th)


# --------------------------------------------------------------------------- #
# Wrapper
# --------------------------------------------------------------------------- #
def convolutional_upsample(x_nchw, conv_w, bn_gamma, bn_beta, bn_mean, bn_var,
                           out_dtype=None, mxu_dtype=None, rows_per_step=None):
    """Forward pass of ConvolutionalUpsample (scale_factor=2, mode='nearest').

    x_nchw: (N, Cin, H, W); conv_w: (Cout, Cin, 1, 1)  (PyTorch layouts).
    Returns (N, Cout, 2H, 2W).
      out_dtype=jnp.bfloat16  halves the dominant HBM writeback (v5e).
      mxu_dtype=jnp.bfloat16  feeds the MXU its native dtype (v6e/v7x).
    Both default to f32-preserving behaviour to match PyTorch numerics.
    """
    # TODO(synk): only scale_factor=2 / mode='nearest' (the module defaults) are implemented.
    N, Cin, H, W = x_nchw.shape
    Cout = conv_w.shape[0]
    if out_dtype is None:
        out_dtype = x_nchw.dtype
    if mxu_dtype is not None:
        mxu_dtype = jnp.dtype(mxu_dtype)

    # --- parameter folding (plain JAX; all tiny) ---
    w_dtype = mxu_dtype if mxu_dtype is not None else x_nchw.dtype
    w_mat = conv_w[:, :, 0, 0].astype(w_dtype)                        # (Cout, Cin)
    scale = (bn_gamma / jnp.sqrt(bn_var + BN_EPS)).astype(jnp.float32)
    bias = (bn_beta - bn_mean * scale).astype(jnp.float32)
    scale = scale.reshape(Cout, 1)
    bias = bias.reshape(Cout, 1)
    rep = jnp.repeat(jnp.eye(W, dtype=jnp.float32), 2, axis=1)        # (W, 2W)

    # NCHW with spatial flattened: per image this is the (Cin, H*W) matmul RHS.
    x_flat = x_nchw.reshape(N, Cin, H * W)

    in_bytes = jnp.dtype(x_nchw.dtype).itemsize
    out_bytes = jnp.dtype(out_dtype).itemsize
    param_bytes = (Cout * Cin * jnp.dtype(w_dtype).itemsize
                   + 2 * Cout * 4 + 2 * W * W * 4)

    vmem_cap = _vmem_capacity_bytes()
    # v7x (64 MiB VMEM): ~5 MiB/step; v5e/v6e (128 MiB): ~16 MiB/step.
    budget = (5 << 20) if vmem_cap <= (64 << 20) else (16 << 20)

    if rows_per_step is None:
        TH, step_bytes = _pick_rows_per_step(N, H, W, Cin, Cout, in_bytes,
                                             out_bytes, param_bytes, budget)
    else:
        TH = rows_per_step
        assert _legal_rows(H, W, TH), \
            "rows_per_step must divide H and satisfy the (8,128) block rules"
        step_bytes = _per_step_vmem_bytes(TH, W, Cin, Cout, in_bytes, out_bytes,
                                          param_bytes)

    vmem_limit = min(3 * vmem_cap // 4, 64 << 20)
    if step_bytes + (2 << 20) > vmem_limit:           # auto-raise, never silently overshoot
        vmem_limit = step_bytes + (2 << 20)
    if vmem_limit > vmem_cap:
        raise ValueError(
            f"tile needs ~{step_bytes >> 20} MiB VMEM, more than this chip provides")

    grid = (N, H // TH)
    cost = pl.CostEstimate(
        flops=2 * N * H * W * Cin * Cout + 8 * N * Cout * H * W * W,
        transcendentals=0,
        bytes_accessed=(x_flat.size * in_bytes
                        + w_mat.size * jnp.dtype(w_dtype).itemsize
                        + scale.size * 4 + bias.size * 4 + rep.size * 4
                        + N * Cout * 4 * H * W * out_bytes),
    )

    def _const_spec(shape, single_buffer):
        idx = lambda n, t: (0, 0)                      # block index never changes
        if single_buffer:
            return pl.BlockSpec(shape, idx, pipeline_mode=pl.Buffered(1))
        return pl.BlockSpec(shape, idx)

    def _run(upsample_impl, single_buffer_consts):
        kernel = functools.partial(_conv_bn_lrelu_up_kernel,
                                   mxu_dtype=mxu_dtype,
                                   upsample_impl=upsample_impl)
        return pl.pallas_call(
            kernel,
            out_shape=jax.ShapeDtypeStruct((N, Cout, 2 * H, 2 * W), out_dtype),
            grid_spec=pltpu.PrefetchScalarGridSpec(
                num_scalar_prefetch=0,
                grid=grid,
                in_specs=[
                    pl.BlockSpec((1, Cin, TH * W), lambda n, t: (n, 0, t)),
                    _const_spec((Cout, Cin), single_buffer_consts),
                    _const_spec((Cout, 1), single_buffer_consts),
                    _const_spec((Cout, 1), single_buffer_consts),
                    _const_spec((W, 2 * W), single_buffer_consts),
                ],
                out_specs=pl.BlockSpec((1, Cout, 2 * TH, 2 * W),
                                       lambda n, t: (n, 0, t, 0)),
            ),
            compiler_params=pltpu.CompilerParams(
                dimension_semantics=("parallel", "parallel"),
                vmem_limit_bytes=int(vmem_limit),
            ),
            cost_estimate=cost,
        )(x_flat, w_mat, scale, bias, rep)

    # Fast path first; degrade gracefully if a lowering corner case (Buffered(1)
    # pipeline_mode or the minor-dim reshape) is rejected on this toolchain.
    attempts = (("vector", True), ("vector", False), ("per_row", False))
    err = None
    for impl, single_buf in attempts:
        try:
            return _run(impl, single_buf)
        except Exception as e:        # noqa: BLE001 — deliberate graceful degrade
            err = e
    raise err


# --------------------------------------------------------------------------- #
# Pure-JAX reference + self-test
# --------------------------------------------------------------------------- #
def _reference(x_nchw, conv_w, bn_gamma, bn_beta, bn_mean, bn_var):
    w_mat = conv_w[:, :, 0, 0]                                   # (Cout, Cin)
    y = jnp.einsum('nchw,oc->nohw', x_nchw, w_mat)
    scale = (bn_gamma / jnp.sqrt(bn_var + BN_EPS)).reshape(1, -1, 1, 1)
    bias = (bn_beta - bn_mean * bn_gamma / jnp.sqrt(bn_var + BN_EPS)).reshape(1, -1, 1, 1)
    y = y * scale + bias
    y = jnp.where(y > 0, y, LEAKY_SLOPE * y)
    y = jnp.repeat(jnp.repeat(y, 2, axis=2), 2, axis=3)          # nearest 2x
    return y


if __name__ == "__main__":
    key = jax.random.PRNGKey(0)
    k_x, k_w, k_g, k_b, k_m, k_v = jax.random.split(key, 6)

    N, Cin, H, W = 2, 4, 16, 16
    Cout = 8

    x = jax.random.normal(k_x, (N, Cin, H, W), dtype=jnp.float32)
    conv_w = jax.random.normal(k_w, (Cout, Cin, 1, 1), dtype=jnp.float32) * 0.1
    bn_gamma = 1.0 + 0.1 * jax.random.normal(k_g, (Cout,), dtype=jnp.float32)
    bn_beta = 0.1 * jax.random.normal(k_b, (Cout,), dtype=jnp.float32)
    bn_mean = 0.1 * jax.random.normal(k_m, (Cout,), dtype=jnp.float32)
    bn_var = jnp.abs(jax.random.normal(k_v, (Cout,), dtype=jnp.float32)) + 0.5

    ref = _reference(x, conv_w, bn_gamma, bn_beta, bn_mean, bn_var)

    # Default (auto tile).
    out = convolutional_upsample(x, conv_w, bn_gamma, bn_beta, bn_mean, bn_var)
    out = jax.block_until_ready(out)
    assert out.shape == (N, Cout, 2 * H, 2 * W), out.shape
    assert jnp.allclose(out, ref, atol=1e-4, rtol=1e-4), \
        float(jnp.max(jnp.abs(out - ref)))

    # Forced multi-step row tiling (exercises the (n, t) index maps).
    out2 = convolutional_upsample(x, conv_w, bn_gamma, bn_beta, bn_mean, bn_var,
                                  rows_per_step=8)
    out2 = jax.block_until_ready(out2)
    assert jnp.allclose(out2, ref, atol=1e-4, rtol=1e-4), \
        float(jnp.max(jnp.abs(out2 - ref)))

    # bf16-fed MXU (v6e/v7x native path); looser tolerance vs. the f32 reference.
    out3 = convolutional_upsample(x, conv_w, bn_gamma, bn_beta, bn_mean, bn_var,
                                  mxu_dtype=jnp.bfloat16)
    out3 = jax.block_until_ready(out3)
    assert jnp.allclose(out3, ref, atol=5e-2, rtol=5e-2), \
        float(jnp.max(jnp.abs(out3 - ref)))

    print("KERNEL_OK")
</pallas_src>

<mosaic_0001>
module attributes {stable_mosaic.version = 11 : i64} {
  func.func @_conv_bn_lrelu_up_kernel(%arg0: i32, %arg1: i32, %arg2: memref<1x4x256xf32, #tpu.memory_space<vmem>>, %arg3: memref<8x4xf32, #tpu.memory_space<vmem>>, %arg4: memref<8x1xf32, #tpu.memory_space<vmem>>, %arg5: memref<8x1xf32, #tpu.memory_space<vmem>>, %arg6: memref<16x32xf32, #tpu.memory_space<vmem>>, %arg7: memref<1x8x32x32xf32, #tpu.memory_space<vmem>>) attributes {dimension_semantics = [#tpu.dimension_semantics<parallel>, #tpu.dimension_semantics<parallel>], iteration_bounds = array<i64: 2, 1>, scalar_prefetch = 0 : i64, scratch_operands = 0 : i64, tpu.core_type = #tpu.core_type<tc>, window_params = [{transform_indices = @transform_0, window_bounds = array<i64: 1, 4, 256>}, {pipeline_mode = #tpu.pipeline_mode<synchronous>, transform_indices = @transform_1, window_bounds = array<i64: 8, 4>}, {pipeline_mode = #tpu.pipeline_mode<synchronous>, transform_indices = @transform_2, window_bounds = array<i64: 8, 1>}, {pipeline_mode = #tpu.pipeline_mode<synchronous>, transform_indices = @transform_3, window_bounds = array<i64: 8, 1>}, {pipeline_mode = #tpu.pipeline_mode<synchronous>, transform_indices = @transform_4, window_bounds = array<i64: 16, 32>}, {transform_indices = @transform_5, window_bounds = array<i64: 1, 8, 32, 32>}]} {
    %c0 = arith.constant 0 : index
    %c0_0 = arith.constant 0 : index
    %c0_1 = arith.constant 0 : index
    %0 = vector.load %arg2[%c0, %c0_0, %c0_1] : memref<1x4x256xf32, #tpu.memory_space<vmem>>, vector<1x4x256xf32>
    %1 = vector.shape_cast %0 : vector<1x4x256xf32> to vector<4x256xf32>
    %c0_2 = arith.constant 0 : index
    %c0_3 = arith.constant 0 : index
    %2 = vector.load %arg3[%c0_2, %c0_3] : memref<8x4xf32, #tpu.memory_space<vmem>>, vector<8x4xf32>
    %cst = arith.constant dense<0.000000e+00> : vector<8x256xf32>
    %3 = tpu.matmul %2, %1, %cst {dimension_numbers = #tpu.dot_dimension_numbers<[1], [0], [0], [1], [0, 0, 1, 1], [], []>} : vector<8x4xf32>, vector<4x256xf32>, vector<8x256xf32> -> vector<8x256xf32>
    %c0_4 = arith.constant 0 : index
    %c0_5 = arith.constant 0 : index
    %4 = vector.load %arg4[%c0_4, %c0_5] : memref<8x1xf32, #tpu.memory_space<vmem>>, vector<8x1xf32>
    %5 = vector.broadcast %4 : vector<8x1xf32> to vector<8x256xf32>
    %6 = arith.mulf %3, %5 : vector<8x256xf32>
    %c0_6 = arith.constant 0 : index
    %c0_7 = arith.constant 0 : index
    %7 = vector.load %arg5[%c0_6, %c0_7] : memref<8x1xf32, #tpu.memory_space<vmem>>, vector<8x1xf32>
    %8 = vector.broadcast %7 : vector<8x1xf32> to vector<8x256xf32>
    %9 = arith.addf %6, %8 : vector<8x256xf32>
    %cst_8 = arith.constant 0.000000e+00 : f32
    %10 = vector.broadcast %cst_8 : f32 to vector<8x256xf32>
    %11 = arith.cmpf ogt, %9, %10 : vector<8x256xf32>
    %cst_9 = arith.constant 1.000000e-01 : f32
    %12 = vector.broadcast %cst_9 : f32 to vector<8x256xf32>
    %13 = arith.mulf %12, %9 : vector<8x256xf32>
    %14 = arith.select %11, %9, %13 : vector<8x256xi1>, vector<8x256xf32>
    %15 = vector.shape_cast %14 : vector<8x256xf32> to vector<8x16x16xf32>
    %16 = vector.shape_cast %15 : vector<8x16x16xf32> to vector<8x16x1x16xf32>
    %17 = vector.shape_cast %16 : vector<8x16x1x16xf32> to vector<8x16x1x16xf32>
    %18 = vector.broadcast %17 : vector<8x16x1x16xf32> to vector<8x16x2x16xf32>
    %19 = vector.shape_cast %18 : vector<8x16x2x16xf32> to vector<8x32x16xf32>
    %20 = vector.shape_cast %19 : vector<8x32x16xf32> to vector<256x16xf32>
    %c0_10 = arith.constant 0 : index
    %c0_11 = arith.constant 0 : index
    %21 = vector.load %arg6[%c0_10, %c0_11] : memref<16x32xf32, #tpu.memory_space<vmem>>, vector<16x32xf32>
    %cst_12 = arith.constant dense<0.000000e+00> : vector<256x32xf32>
    %22 = tpu.matmul %20, %21, %cst_12 {dimension_numbers = #tpu.dot_dimension_numbers<[1], [0], [0], [1], [0, 0, 1, 1], [], []>} : vector<256x16xf32>, vector<16x32xf32>, vector<256x32xf32> -> vector<256x32xf32>
    %23 = vector.shape_cast %22 : vector<256x32xf32> to vector<8x32x32xf32>
    %c0_13 = arith.constant 0 : index
    %c0_14 = arith.constant 0 : index
    %c0_15 = arith.constant 0 : index
    %c0_16 = arith.constant 0 : index
    %24 = vector.load %arg7[%c0_13, %c0_14, %c0_15, %c0_16] : memref<1x8x32x32xf32, #tpu.memory_space<vmem>>, vector<1x8x32x32xf32>
    %25 = vector.shape_cast %24 : vector<1x8x32x32xf32> to vector<8x32x32xf32>
    %26 = vector.shape_cast %23 : vector<8x32x32xf32> to vector<1x8x32x32xf32>
    tpu.vector_store %arg7[%c0_13, %c0_14, %c0_15, %c0_16], %26 {strides = array<i32>} : memref<1x8x32x32xf32, #tpu.memory_space<vmem>>, vector<1x8x32x32xf32>,
    return
  }
  func.func @transform_0(%arg0: i32, %arg1: i32) -> (i32, i32, i32) {
    %c0_i32 = arith.constant 0 : i32
    %c0_i32_0 = arith.constant 0 : i32
    return %arg0, %c0_i32, %arg1 : i32, i32, i32
  }
  func.func @transform_1(%arg0: i32, %arg1: i32) -> (i32, i32) {
    %c0_i32 = arith.constant 0 : i32
    %c0_i32_0 = arith.constant 0 : i32
    %c0_i32_1 = arith.constant 0 : i32
    return %c0_i32, %c0_i32_0 : i32, i32
  }
  func.func @transform_2(%arg0: i32, %arg1: i32) -> (i32, i32) {
    %c0_i32 = arith.constant 0 : i32
    %c0_i32_0 = arith.constant 0 : i32
    %c0_i32_1 = arith.constant 0 : i32
    return %c0_i32, %c0_i32_0 : i32, i32
  }
  func.func @transform_3(%arg0: i32, %arg1: i32) -> (i32, i32) {
    %c0_i32 = arith.constant 0 : i32
    %c0_i32_0 = arith.constant 0 : i32
    %c0_i32_1 = arith.constant 0 : i32
    return %c0_i32, %c0_i32_0 : i32, i32
  }
  func.func @transform_4(%arg0: i32, %arg1: i32) -> (i32, i32) {
    %c0_i32 = arith.constant 0 : i32
    %c0_i32_0 = arith.constant 0 : i32
    %c0_i32_1 = arith.constant 0 : i32
    return %c0_i32, %c0_i32_0 : i32, i32
  }
  func.func @transform_5(%arg0: i32, %arg1: i32) -> (i32, i32, i32, i32) {
    %c0_i32 = arith.constant 0 : i32
    %c0_i32_0 = arith.constant 0 : i32
    %c0_i32_1 = arith.constant 0 : i32
    return %arg0, %c0_i32, %arg1, %c0_i32_0 : i32, i32, i32, i32
  }
}

module attributes {stable_mosaic.version = 11 : i64} {
  func.func @_conv_bn_lrelu_up_kernel(%arg0: i32, %arg1: i32, %arg2: memref<1x4x256xf32, #tpu.memory_space<vmem>>, %arg3: memref<8x4xf32, #tpu.memory_space<vmem>>, %arg4: memref<8x1xf32, #tpu.memory_space<vmem>>, %arg5: memref<8x1xf32, #tpu.memory_space<vmem>>, %arg6: memref<16x32xf32, #tpu.memory_space<vmem>>, %arg7: memref<1x8x32x32xf32, #tpu.memory_space<vmem>>) attributes {dimension_semantics = [#tpu.dimension_semantics<parallel>, #tpu.dimension_semantics<parallel>], iteration_bounds = array<i64: 2, 1>, scalar_prefetch = 0 : i64, scratch_operands = 0 : i64, tpu.core_type = #tpu.core_type<tc>, window_params = [{transform_indices = @transform_0, window_bounds = array<i64: 1, 4, 256>}, {pipeline_mode = #tpu.pipeline_mode<synchronous>, transform_indices = @transform_1, window_bounds = array<i64: 8, 4>}, {pipeline_mode = #tpu.pipeline_mode<synchronous>, transform_indices = @transform_2, window_bounds = array<i64: 8, 1>}, {pipeline_mode = #tpu.pipeline_mode<synchronous>, transform_indices = @transform_3, window_bounds = array<i64: 8, 1>}, {pipeline_mode = #tpu.pipeline_mode<synchronous>, transform_indices = @transform_4, window_bounds = array<i64: 16, 32>}, {transform_indices = @transform_5, window_bounds = array<i64: 1, 8, 32, 32>}]} {
    %c0 = arith.constant 0 : index
    %c0_0 = arith.constant 0 : index
    %c0_1 = arith.constant 0 : index
    %0 = vector.load %arg2[%c0, %c0_0, %c0_1] : memref<1x4x256xf32, #tpu.memory_space<vmem>>, vector<1x4x256xf32>
    %1 = vector.shape_cast %0 : vector<1x4x256xf32> to vector<4x256xf32>
    %c0_2 = arith.constant 0 : index
    %c0_3 = arith.constant 0 : index
    %2 = vector.load %arg3[%c0_2, %c0_3] : memref<8x4xf32, #tpu.memory_space<vmem>>, vector<8x4xf32>
    %cst = arith.constant dense<0.000000e+00> : vector<8x256xf32>
    %3 = tpu.matmul %2, %1, %cst {dimension_numbers = #tpu.dot_dimension_numbers<[1], [0], [0], [1], [0, 0, 1, 1], [], []>} : vector<8x4xf32>, vector<4x256xf32>, vector<8x256xf32> -> vector<8x256xf32>
    %c0_4 = arith.constant 0 : index
    %c0_5 = arith.constant 0 : index
    %4 = vector.load %arg4[%c0_4, %c0_5] : memref<8x1xf32, #tpu.memory_space<vmem>>, vector<8x1xf32>
    %5 = vector.broadcast %4 : vector<8x1xf32> to vector<8x256xf32>
    %6 = arith.mulf %3, %5 : vector<8x256xf32>
    %c0_6 = arith.constant 0 : index
    %c0_7 = arith.constant 0 : index
    %7 = vector.load %arg5[%c0_6, %c0_7] : memref<8x1xf32, #tpu.memory_space<vmem>>, vector<8x1xf32>
    %8 = vector.broadcast %7 : vector<8x1xf32> to vector<8x256xf32>
    %9 = arith.addf %6, %8 : vector<8x256xf32>
    %cst_8 = arith.constant 0.000000e+00 : f32
    %10 = vector.broadcast %cst_8 : f32 to vector<8x256xf32>
    %11 = arith.cmpf ogt, %9, %10 : vector<8x256xf32>
    %cst_9 = arith.constant 1.000000e-01 : f32
    %12 = vector.broadcast %cst_9 : f32 to vector<8x256xf32>
    %13 = arith.mulf %12, %9 : vector<8x256xf32>
    %14 = arith.select %11, %9, %13 : vector<8x256xi1>, vector<8x256xf32>
    %15 = vector.shape_cast %14 : vector<8x256xf32> to vector<8x16x16xf32>
    %16 = vector.shape_cast %15 : vector<8x16x16xf32> to vector<8x16x1x16xf32>
    %17 = vector.shape_cast %16 : vector<8x16x1x16xf32> to vector<8x16x1x16xf32>
    %18 = vector.broadcast %17 : vector<8x16x1x16xf32> to vector<8x16x2x16xf32>
    %19 = vector.shape_cast %18 : vector<8x16x2x16xf32> to vector<8x32x16xf32>
    %20 = vector.shape_cast %19 : vector<8x32x16xf32> to vector<256x16xf32>
    %c0_10 = arith.constant 0 : index
    %c0_11 = arith.constant 0 : index
    %21 = vector.load %arg6[%c0_10, %c0_11] : memref<16x32xf32, #tpu.memory_space<vmem>>, vector<16x32xf32>
    %cst_12 = arith.constant dense<0.000000e+00> : vector<256x32xf32>
    %22 = tpu.matmul %20, %21, %cst_12 {dimension_numbers = #tpu.dot_dimension_numbers<[1], [0], [0], [1], [0, 0, 1, 1], [], []>} : vector<256x16xf32>, vector<16x32xf32>, vector<256x32xf32> -> vector<256x32xf32>
    %23 = vector.shape_cast %22 : vector<256x32xf32> to vector<8x32x32xf32>
    %c0_13 = arith.constant 0 : index
    %c0_14 = arith.constant 0 : index
    %c0_15 = arith.constant 0 : index
    %c0_16 = arith.constant 0 : index
    %24 = vector.load %arg7[%c0_13, %c0_14, %c0_15, %c0_16] : memref<1x8x32x32xf32, #tpu.memory_space<vmem>>, vector<1x8x32x32xf32>
    %25 = vector.shape_cast %24 : vector<1x8x32x32xf32> to vector<8x32x32xf32>
    %26 = vector.shape_cast %23 : vector<8x32x32xf32> to vector<1x8x32x32xf32>
    tpu.vector_store %arg7[%c0_13, %c0_14, %c0_15, %c0_16], %26 {strides = array<i32>} : memref<1x8x32x32xf32, #tpu.memory_space<vmem>>, vector<1x8x32x32xf32>,
    return
  }
  func.func @transform_0(%arg0: i32, %arg1: i32) -> (i32, i32, i32) {
    %c0_i32 = arith.constant 0 : i32
    %c0_i32_0 = arith.constant 0 : i32
    return %arg0, %c0_i32, %arg1 : i32, i32, i32
  }
  func.func @transform_1(%arg0: i32, %arg1: i32) -> (i32, i32) {
    %c0_i32 = arith.constant 0 : i32
    %c0_i32_0 = arith.constant 0 : i32
    %c0_i32_1 = arith.constant 0 : i32
    return %c0_i32, %c0_i32_0 : i32, i32
  }
  func.func @transform_2(%arg0: i32, %arg1: i32) -> (i32, i32) {
    %c0_i32 = arith.constant 0 : i32
    %c0_i32_0 = arith.constant 0 : i32
    %c0_i32_1 = arith.constant 0 : i32
    return %c0_i32, %c0_i32_0 : i32, i32
  }
  func.func @transform_3(%arg0: i32, %arg1: i32) -> (i32, i32) {
    %c0_i32 = arith.constant 0 : i32
    %c0_i32_0 = arith.constant 0 : i32
    %c0_i32_1 = arith.constant 0 : i32
    return %c0_i32, %c0_i32_0 : i32, i32
  }
  func.func @transform_4(%arg0: i32, %arg1: i32) -> (i32, i32) {
    %c0_i32 = arith.constant 0 : i32
    %c0_i32_0 = arith.constant 0 : i32
    %c0_i32_1 = arith.constant 0 : i32
    return %c0_i32, %c0_i32_0 : i32, i32
  }
  func.func @transform_5(%arg0: i32, %arg1: i32) -> (i32, i32, i32, i32) {
    %c0_i32 = arith.constant 0 : i32
    %c0_i32_0 = arith.constant 0 : i32
    %c0_i32_1 = arith.constant 0 : i32
    return %arg0, %c0_i32, %arg1, %c0_i32_0 : i32, i32, i32, i32
  }
}

module attributes {stable_mosaic.version = 11 : i64} {
  func.func @_conv_bn_lrelu_up_kernel(%arg0: i32, %arg1: i32, %arg2: memref<1x4x256xf32, #tpu.memory_space<vmem>>, %arg3: memref<8x4xf32, #tpu.memory_space<vmem>>, %arg4: memref<8x1xf32, #tpu.memory_space<vmem>>, %arg5: memref<8x1xf32, #tpu.memory_space<vmem>>, %arg6: memref<16x32xf32, #tpu.memory_space<vmem>>, %arg7: memref<1x8x32x32xf32, #tpu.memory_space<vmem>>) attributes {dimension_semantics = [#tpu.dimension_semantics<parallel>, #tpu.dimension_semantics<parallel>], iteration_bounds = array<i64: 2, 1>, scalar_prefetch = 0 : i64, scratch_operands = 0 : i64, tpu.core_type = #tpu.core_type<tc>, window_params = [{transform_indices = @transform_0, window_bounds = array<i64: 1, 4, 256>}, {pipeline_mode = #tpu.pipeline_mode<synchronous>, transform_indices = @transform_1, window_bounds = array<i64: 8, 4>}, {pipeline_mode = #tpu.pipeline_mode<synchronous>, transform_indices = @transform_2, window_bounds = array<i64: 8, 1>}, {pipeline_mode = #tpu.pipeline_mode<synchronous>, transform_indices = @transform_3, window_bounds = array<i64: 8, 1>}, {pipeline_mode = #tpu.pipeline_mode<synchronous>, transform_indices = @transform_4, window_bounds = array<i64: 16, 32>}, {transform_indices = @transform_5, window_bounds = array<i64: 1, 8, 32, 32>}]} {
    %c0 = arith.constant 0 : index
    %c0_0 = arith.constant 0 : index
    %c0_1 = arith.constant 0 : index
    %0 = vector.load %arg2[%c0, %c0_0, %c0_1] : memref<1x4x256xf32, #tpu.memory_space<vmem>>, vector<1x4x256xf32>
    %1 = vector.shape_cast %0 : vector<1x4x256xf32> to vector<4x256xf32>
    %c0_2 = arith.constant 0 : index
    %c0_3 = arith.constant 0 : index
    %2 = vector.load %arg3[%c0_2, %c0_3] : memref<8x4xf32, #tpu.memory_space<vmem>>, vector<8x4xf32>
    %cst = arith.constant dense<0.000000e+00> : vector<8x256xf32>
    %3 = tpu.matmul %2, %1, %cst {dimension_numbers = #tpu.dot_dimension_numbers<[1], [0], [0], [1], [0, 0, 1, 1], [], []>} : vector<8x4xf32>, vector<4x256xf32>, vector<8x256xf32> -> vector<8x256xf32>
    %c0_4 = arith.constant 0 : index
    %c0_5 = arith.constant 0 : index
    %4 = vector.load %arg4[%c0_4, %c0_5] : memref<8x1xf32, #tpu.memory_space<vmem>>, vector<8x1xf32>
    %5 = vector.broadcast %4 : vector<8x1xf32> to vector<8x256xf32>
    %6 = arith.mulf %3, %5 : vector<8x256xf32>
    %c0_6 = arith.constant 0 : index
    %c0_7 = arith.constant 0 : index
    %7 = vector.load %arg5[%c0_6, %c0_7] : memref<8x1xf32, #tpu.memory_space<vmem>>, vector<8x1xf32>
    %8 = vector.broadcast %7 : vector<8x1xf32> to vector<8x256xf32>
    %9 = arith.addf %6, %8 : vector<8x256xf32>
    %cst_8 = arith.constant 0.000000e+00 : f32
    %10 = vector.broadcast %cst_8 : f32 to vector<8x256xf32>
    %11 = arith.cmpf ogt, %9, %10 : vector<8x256xf32>
    %cst_9 = arith.constant 1.000000e-01 : f32
    %12 = vector.broadcast %cst_9 : f32 to vector<8x256xf32>
    %13 = arith.mulf %12, %9 : vector<8x256xf32>
    %14 = arith.select %11, %9, %13 : vector<8x256xi1>, vector<8x256xf32>
    %15 = vector.extract_strided_slice %14 {offsets = [0, 0], sizes = [8, 16], strides = [1, 1]} : vector<8x256xf32> to vector<8x16xf32>
    %c0_10 = arith.constant 0 : index
    %c0_11 = arith.constant 0 : index
    %16 = vector.load %arg6[%c0_10, %c0_11] : memref<16x32xf32, #tpu.memory_space<vmem>>, vector<16x32xf32>
    %cst_12 = arith.constant dense<0.000000e+00> : vector<8x32xf32>
    %17 = tpu.matmul %15, %16, %cst_12 {dimension_numbers = #tpu.dot_dimension_numbers<[1], [0], [0], [1], [0, 0, 1, 1], [], []>} : vector<8x16xf32>, vector<16x32xf32>, vector<8x32xf32> -> vector<8x32xf32>
    %c0_13 = arith.constant 0 : index
    %c0_14 = arith.constant 0 : index
    %c0_15 = arith.constant 0 : index
    %c0_16 = arith.constant 0 : index
    %18 = vector.load %arg7[%c0_13, %c0_14, %c0_15, %c0_16] : memref<1x8x32x32xf32, #tpu.memory_space<vmem>>, vector<1x8x1x32xf32>
    %19 = vector.shape_cast %18 : vector<1x8x1x32xf32> to vector<8x32xf32>
    %20 = vector.shape_cast %17 : vector<8x32xf32> to vector<1x8x1x32xf32>
    tpu.vector_store %arg7[%c0_13, %c0_14, %c0_15, %c0_16], %20 {strides = array<i32>} : memref<1x8x32x32xf32, #tpu.memory_space<vmem>>, vector<1x8x1x32xf32>,
    %c0_17 = arith.constant 0 : index
    %c0_18 = arith.constant 0 : index
    %c1 = arith.constant 1 : index
    %c0_19 = arith.constant 0 : index
    %21 = vector.load %arg7[%c0_17, %c0_18, %c1, %c0_19] : memref<1x8x32x32xf32, #tpu.memory_space<vmem>>, vector<1x8x1x32xf32>
    %22 = vector.shape_cast %21 : vector<1x8x1x32xf32> to vector<8x32xf32>
    %23 = vector.shape_cast %17 : vector<8x32xf32> to vector<1x8x1x32xf32>
    tpu.vector_store %arg7[%c0_17, %c0_18, %c1, %c0_19], %23 {strides = array<i32>} : memref<1x8x32x32xf32, #tpu.memory_space<vmem>>, vector<1x8x1x32xf32>,
    %24 = vector.extract_strided_slice %14 {offsets = [0, 16], sizes = [8, 16], strides = [1, 1]} : vector<8x256xf32> to vector<8x16xf32>
    %c0_20 = arith.constant 0 : index
    %c0_21 = arith.constant 0 : index
    %25 = vector.load %arg6[%c0_20, %c0_21] : memref<16x32xf32, #tpu.memory_space<vmem>>, vector<16x32xf32>
    %cst_22 = arith.constant dense<0.000000e+00> : vector<8x32xf32>
    %26 = tpu.matmul %24, %25, %cst_22 {dimension_numbers = #tpu.dot_dimension_numbers<[1], [0], [0], [1], [0, 0, 1, 1], [], []>} : vector<8x16xf32>, vector<16x32xf32>, vector<8x32xf32> -> vector<8x32xf32>
    %c0_23 = arith.constant 0 : index
    %c0_24 = arith.constant 0 : index
    %c2 = arith.constant 2 : index
    %c0_25 = arith.constant 0 : index
    %27 = vector.load %arg7[%c0_23, %c0_24, %c2, %c0_25] : memref<1x8x32x32xf32, #tpu.memory_space<vmem>>, vector<1x8x1x32xf32>
    %28 = vector.shape_cast %27 : vector<1x8x1x32xf32> to vector<8x32xf32>
    %29 = vector.shape_cast %26 : vector<8x32xf32> to vector<1x8x1x32xf32>
    tpu.vector_store %arg7[%c0_23, %c0_24, %c2, %c0_25], %29 {strides = array<i32>} : memref<1x8x32x32xf32, #tpu.memory_space<vmem>>, vector<1x8x1x32xf32>,
    %c0_26 = arith.constant 0 : index
    %c0_27 = arith.constant 0 : index
    %c3 = arith.constant 3 : index
    %c0_28 = arith.constant 0 : index
    %30 = vector.load %arg7[%c0_26, %c0_27, %c3, %c0_28] : memref<1x8x32x32xf32, #tpu.memory_space<vmem>>, vector<1x8x1x32xf32>
    %31 = vector.shape_cast %30 : vector<1x8x1x32xf32> to vector<8x32xf32>
    %32 = vector.shape_cast %26 : vector<8x32xf32> to vector<1x8x1x32xf32>
    tpu.vector_store %arg7[%c0_26, %c0_27, %c3, %c0_28], %32 {strides = array<i32>} : memref<1x8x32x32xf32, #tpu.memory_space<vmem>>, vector<1x8x1x32xf32>,
    %33 = vector.extract_strided_slice %14 {offsets = [0, 32], sizes = [8, 16], strides = [1, 1]} : vector<8x256xf32> to vector<8x16xf32>
    %c0_29 = arith.constant 0 : index
    %c0_30 = arith.constant 0 : index
    %34 = vector.load %arg6[%c0_29, %c0_30] : memref<16x32xf32, #tpu.memory_space<vmem>>, vector<16x32xf32>
    %cst_31 = arith.constant dense<0.000000e+00> : vector<8x32xf32>
    %35 = tpu.matmul %33, %34, %cst_31 {dimension_numbers = #tpu.dot_dimension_numbers<[1], [0], [0], [1], [0, 0, 1, 1], [], []>} : vector<8x16xf32>, vector<16x32xf32>, vector<8x32xf32> -> vector<8x32xf32>
    %c0_32 = arith.constant 0 : index
    %c0_33 = arith.constant 0 : index
    %c4 = arith.constant 4 : index
    %c0_34 = arith.constant 0 : index
    %36 = vector.load %arg7[%c0_32, %c0_33, %c4, %c0_34] : memref<1x8x32x32xf32, #tpu.memory_space<vmem>>, vector<1x8x1x32xf32>
    %37 = vector.shape_cast %36 : vector<1x8x1x32xf32> to vector<8x32xf32>
    %38 = vector.shape_cast %35 : vector<8x32xf32> to vector<1x8x1x32xf32>
    tpu.vector_store %arg7[%c0_32, %c0_33, %c4, %c0_34], %38 {strides = array<i32>} : memref<1x8x32x32xf32, #tpu.memory_space<vmem>>, vector<1x8x1x32xf32>,
    %c0_35 = arith.constant 0 : index
    %c0_36 = arith.constant 0 : index
    %c5 = arith.constant 5 : index
    %c0_37 = arith.constant 0 : index
    %39 = vector.load %arg7[%c0_35, %c0_36, %c5, %c0_37] : memref<1x8x32x32xf32, #tpu.memory_space<vmem>>, vector<1x8x1x32xf32>
    %40 = vector.shape_cast %39 : vector<1x8x1x32xf32> to vector<8x32xf32>
    %41 = vector.shape_cast %35 : vector<8x32xf32> to vector<1x8x1x32xf32>
    tpu.vector_store %arg7[%c0_35, %c0_36, %c5, %c0_37], %41 {strides = array<i32>} : memref<1x8x32x32xf32, #tpu.memory_space<vmem>>, vector<1x8x1x32xf32>,
    %42 = vector.extract_strided_slice %14 {offsets = [0, 48], sizes = [8, 16], strides = [1, 1]} : vector<8x256xf32> to vector<8x16xf32>
    %c0_38 = arith.constant 0 : index
    %c0_39 = arith.constant 0 : index
    %43 = vector.load %arg6[%c0_38, %c0_39] : memref<16x32xf32, #tpu.memory_space<vmem>>, vector<16x32xf32>
    %cst_40 = arith.constant dense<0.000000e+00> : vector<8x32xf32>
    %44 = tpu.matmul %42, %43, %cst_40 {dimension_numbers = #tpu.dot_dimension_numbers<[1], [0], [0], [1], [0, 0, 1, 1], [], []>} : vector<8x16xf32>, vector<16x32xf32>, vector<8x32xf32> -> vector<8x32xf32>
    %c0_41 = arith.constant 0 : index
    %c0_42 = arith.constant 0 : index
    %c6 = arith.constant 6 : index
    %c0_43 = arith.constant 0 : index
    %45 = vector.load %arg7[%c0_41, %c0_42, %c6, %c0_43] : memref<1x8x32x32xf32, #tpu.memory_space<vmem>>, vector<1x8x1x32xf32>
    %46 = vector.shape_cast %45 : vector<1x8x1x32xf32> to vector<8x32xf32>
    %47 = vector.shape_cast %44 : vector<8x32xf32> to vector<1x8x1x32xf32>
    tpu.vector_store %arg7[%c0_41, %c0_42, %c6, %c0_43], %47 {strides = array<i32>} : memref<1x8x32x32xf32, #tpu.memory_space<vmem>>, vector<1x8x1x32xf32>,
    %c0_44 = arith.constant 0 : index
    %c0_45 = arith.constant 0 : index
    %c7 = arith.constant 7 : index
    %c0_46 = arith.constant 0 : index
    %48 = vector.load %arg7[%c0_44, %c0_45, %c7, %c0_46] : memref<1x8x32x32xf32, #tpu.memory_space<vmem>>, vector<1x8x1x32xf32>
    %49 = vector.shape_cast %48 : vector<1x8x1x32xf32> to vector<8x32xf32>
    %50 = vector.shape_cast %44 : vector<8x32xf32> to vector<1x8x1x32xf32>
    tpu.vector_store %arg7[%c0_44, %c0_45, %c7, %c0_46], %50 {strides = array<i32>} : memref<1x8x32x32xf32, #tpu.memory_space<vmem>>, vector<1x8x1x32xf32>,
    %51 = vector.extract_strided_slice %14 {offsets = [0, 64], sizes = [8, 16], strides = [1, 1]} : vector<8x256xf32> to vector<8x16xf32>
    %c0_47 = arith.constant 0 : index
    %c0_48 = arith.constant 0 : index
    %52 = vector.load %arg6[%c0_47, %c0_48] : memref<16x32xf32, #tpu.memory_space<vmem>>, vector<16x32xf32>
    %cst_49 = arith.constant dense<0.000000e+00> : vector<8x32xf32>
    %53 = tpu.matmul %51, %52, %cst_49 {dimension_numbers = #tpu.dot_dimension_numbers<[1], [0], [0], [1], [0, 0, 1, 1], [], []>} : vector<8x16xf32>, vector<16x32xf32>, vector<8x32xf32> -> vector<8x32xf32>
    %c0_50 = arith.constant 0 : index
    %c0_51 = arith.constant 0 : index
    %c8 = arith.constant 8 : index
    %c0_52 = arith.constant 0 : index
    %54 = vector.load %arg7[%c0_50, %c0_51, %c8, %c0_52] : memref<1x8x32x32xf32, #tpu.memory_space<vmem>>, vector<1x8x1x32xf32>
    %55 = vector.shape_cast %54 : vector<1x8x1x32xf32> to vector<8x32xf32>
    %56 = vector.shape_cast %53 : vector<8x32xf32> to vector<1x8x1x32xf32>
    tpu.vector_store %arg7[%c0_50, %c0_51, %c8, %c0_52], %56 {strides = array<i32>} : memref<1x8x32x32xf32, #tpu.memory_space<vmem>>, vector<1x8x1x32xf32>,
    %c0_53 = arith.constant 0 : index
    %c0_54 = arith.constant 0 : index
    %c9 = arith.constant 9 : index
    %c0_55 = arith.constant 0 : index
    %57 = vector.load %arg7[%c0_53, %c0_54, %c9, %c0_55] : memref<1x8x32x32xf32, #tpu.memory_space<vmem>>, vector<1x8x1x32xf32>
    %58 = vector.shape_cast %57 : vector<1x8x1x32xf32> to vector<8x32xf32>
    %59 = vector.shape_cast %53 : vector<8x32xf32> to vector<1x8x1x32xf32>
    tpu.vector_store %arg7[%c0_53, %c0_54, %c9, %c0_55], %59 {strides = array<i32>} : memref<1x8x32x32xf32, #tpu.memory_space<vmem>>, vector<1x8x1x32xf32>,
    %60 = vector.extract_strided_slice %14 {offsets = [0, 80], sizes = [8, 16], strides = [1, 1]} : vector<8x256xf32> to vector<8x16xf32>
    %c0_56 = arith.constant 0 : index
    %c0_57 = arith.constant 0 : index
    %61 = vector.load %arg6[%c0_56, %c0_57] : memref<16x32xf32, #tpu.memory_space<vmem>>, vector<16x32xf32>
    %cst_58 = arith.constant dense<0.000000e+00> : vector<8x32xf32>
    %62 = tpu.matmul %60, %61, %cst_58 {dimension_numbers = #tpu.dot_dimension_numbers<[1], [0], [0], [1], [0, 0, 1, 1], [], []>} : vector<8x16xf32>, vector<16x32xf32>, vector<8x32xf32> -> vector<8x32xf32>
    %c0_59 = arith.constant 0 : index
    %c0_60 = arith.constant 0 : index
    %c10 = arith.constant 10 : index
    %c0_61 = arith.constant 0 : index
    %63 = vector.load %arg7[%c0_59, %c0_60, %c10, %c0_61] : memref<1x8x32x32xf32, #tpu.memory_space<vmem>>, vector<1x8x1x32xf32>
    %64 = vector.shape_cast %63 : vector<1x8x1x32xf32> to vector<8x32xf32>
    %65 = vector.shape_cast %62 : vector<8x32xf32> to vector<1x8x1x32xf32>
    tpu.vector_store %arg7[%c0_59, %c0_60, %c10, %c0_61], %65 {strides = array<i32>} : memref<1x8x32x32xf32, #tpu.memory_space<vmem>>, vector<1x8x1x32xf32>,
    %c0_62 = arith.constant 0 : index
    %c0_63 = arith.constant 0 : index
    %c11 = arith.constant 11 : index
    %c0_64 = arith.constant 0 : index
    %66 = vector.load %arg7[%c0_62, %c0_63, %c11, %c0_64] : memref<1x8x32x32xf32, #tpu.memory_space<vmem>>, vector<1x8x1x32xf32>
    %67 = vector.shape_cast %66 : vector<1x8x1x32xf32> to vector<8x32xf32>
    %68 = vector.shape_cast %62 : vector<8x32xf32> to vector<1x8x1x32xf32>
    tpu.vector_store %arg7[%c0_62, %c0_63, %c11, %c0_64], %68 {strides = array<i32>} : memref<1x8x32x32xf32, #tpu.memory_space<vmem>>, vector<1x8x1x32xf32>,
    %69 = vector.extract_strided_slice %14 {offsets = [0, 96], sizes = [8, 16], strides = [1, 1]} : vector<8x256xf32> to vector<8x16xf32>
    %c0_65 = arith.constant 0 : index
    %c0_66 = arith.constant 0 : index
    %70 = vector.load %arg6[%c0_65, %c0_66] : memref<16x32xf32, #tpu.memory_space<vmem>>, vector<16x32xf32>
    %cst_67 = arith.constant dense<0.000000e+00> : vector<8x32xf32>
    %71 = tpu.matmul %69, %70, %cst_67 {dimension_numbers = #tpu.dot_dimension_numbers<[1], [0], [0], [1], [0, 0, 1, 1], [], []>} : vector<8x16xf32>, vector<16x32xf32>, vector<8x32xf32> -> vector<8x32xf32>
    %c0_68 = arith.constant 0 : index
    %c0_69 = arith.constant 0 : index
    %c12 = arith.constant 12 : index
    %c0_70 = arith.constant 0 : index
    %72 = vector.load %arg7[%c0_68, %c0_69, %c12, %c0_70] : memref<1x8x32x32xf32, #tpu.memory_space<vmem>>, vector<1x8x1x32xf32>
    %73 = vector.shape_cast %72 : vector<1x8x1x32xf32> to vector<8x32xf32>
    %74 = vector.shape_cast %71 : vector<8x32xf32> to vector<1x8x1x32xf32>
    tpu.vector_store %arg7[%c0_68, %c0_69, %c12, %c0_70], %74 {strides = array<i32>} : memref<1x8x32x32xf32, #tpu.memory_space<vmem>>, vector<1x8x1x32xf32>,
    %c0_71 = arith.constant 0 : index
    %c0_72 = arith.constant 0 : index
    %c13 = arith.constant 13 : index
    %c0_73 = arith.constant 0 : index
    %75 = vector.load %arg7[%c0_71, %c0_72, %c13, %c0_73] : memref<1x8x32x32xf32, #tpu.memory_space<vmem>>, vector<1x8x1x32xf32>
    %76 = vector.shape_cast %75 : vector<1x8x1x32xf32> to vector<8x32xf32>
    %77 = vector.shape_cast %71 : vector<8x32xf32> to vector<1x8x1x32xf32>
    tpu.vector_store %arg7[%c0_71, %c0_72, %c13, %c0_73], %77 {strides = array<i32>} : memref<1x8x32x32xf32, #tpu.memory_space<vmem>>, vector<1x8x1x32xf32>,
    %78 = vector.extract_strided_slice %14 {offsets = [0, 112], sizes = [8, 16], strides = [1, 1]} : vector<8x256xf32> to vector<8x16xf32>
    %c0_74 = arith.constant 0 : index
    %c0_75 = arith.constant 0 : index
    %79 = vector.load %arg6[%c0_74, %c0_75] : memref<16x32xf32, #tpu.memory_space<vmem>>, vector<16x32xf32>
    %cst_76 = arith.constant dense<0.000000e+00> : vector<8x32xf32>
    %80 = tpu.matmul %78, %79, %cst_76 {dimension_numbers = #tpu.dot_dimension_numbers<[1], [0], [0], [1], [0, 0, 1, 1], [], []>} : vector<8x16xf32>, vector<16x32xf32>, vector<8x32xf32> -> vector<8x32xf32>
    %c0_77 = arith.constant 0 : index
    %c0_78 = arith.constant 0 : index
    %c14 = arith.constant 14 : index
    %c0_79 = arith.constant 0 : index
    %81 = vector.load %arg7[%c0_77, %c0_78, %c14, %c0_79] : memref<1x8x32x32xf32, #tpu.memory_space<vmem>>, vector<1x8x1x32xf32>
    %82 = vector.shape_cast %81 : vector<1x8x1x32xf32> to vector<8x32xf32>
    %83 = vector.shape_cast %80 : vector<8x32xf32> to vector<1x8x1x32xf32>
    tpu.vector_store %arg7[%c0_77, %c0_78, %c14, %c0_79], %83 {strides = array<i32>} : memref<1x8x32x32xf32, #tpu.memory_space<vmem>>, vector<1x8x1x32xf32>,
    %c0_80 = arith.constant 0 : index
    %c0_81 = arith.constant 0 : index
    %c15 = arith.constant 15 : index
    %c0_82 = arith.constant 0 : index
    %84 = vector.load %arg7[%c0_80, %c0_81, %c15, %c0_82] : memref<1x8x32x32xf32, #tpu.memory_space<vmem>>, vector<1x8x1x32xf32>
    %85 = vector.shape_cast %84 : vector<1x8x1x32xf32> to vector<8x32xf32>
    %86 = vector.shape_cast %80 : vector<8x32xf32> to vector<1x8x1x32xf32>
    tpu.vector_store %arg7[%c0_80, %c0_81, %c15, %c0_82], %86 {strides = array<i32>} : memref<1x8x32x32xf32, #tpu.memory_space<vmem>>, vector<1x8x1x32xf32>,
    %87 = vector.extract_strided_slice %14 {offsets = [0, 128], sizes = [8, 16], strides = [1, 1]} : vector<8x256xf32> to vector<8x16xf32>
    %c0_83 = arith.constant 0 : index
    %c0_84 = arith.constant 0 : index
    %88 = vector.load %arg6[%c0_83, %c0_84] : memref<16x32xf32, #tpu.memory_space<vmem>>, vector<16x32xf32>
    %cst_85 = arith.constant dense<0.000000e+00> : vector<8x32xf32>
    %89 = tpu.matmul %87, %88, %cst_85 {dimension_numbers = #tpu.dot_dimension_numbers<[1], [0], [0], [1], [0, 0, 1, 1], [], []>} : vector<8x16xf32>, vector<16x32xf32>, vector<8x32xf32> -> vector<8x32xf32>
    %c0_86 = arith.constant 0 : index
    %c0_87 = arith.constant 0 : index
    %c16 = arith.constant 16 : index
    %c0_88 = arith.constant 0 : index
    %90 = vector.load %arg7[%c0_86, %c0_87, %c16, %c0_88] : memref<1x8x32x32xf32, #tpu.memory_space<vmem>>, vector<1x8x1x32xf32>
    %91 = vector.shape_cast %90 : vector<1x8x1x32xf32> to vector<8x32xf32>
    %92 = vector.shape_cast %89 : vector<8x32xf32> to vector<1x8x1x32xf32>
    tpu.vector_store %arg7[%c0_86, %c0_87, %c16, %c0_88], %92 {strides = array<i32>} : memref<1x8x32x32xf32, #tpu.memory_space<vmem>>, vector<1x8x1x32xf32>,
    %c0_89 = arith.constant 0 : index
    %c0_90 = arith.constant 0 : index
    %c17 = arith.constant 17 : index
    %c0_91 = arith.constant 0 : index
    %93 = vector.load %arg7[%c0_89, %c0_90, %c17, %c0_91] : memref<1x8x32x32xf32, #tpu.memory_space<vmem>>, vector<1x8x1x32xf32>
    %94 = vector.shape_cast %93 : vector<1x8x1x32xf32> to vector<8x32xf32>
    %95 = vector.shape_cast %89 : vector<8x32xf32> to vector<1x8x1x32xf32>
    tpu.vector_store %arg7[%c0_89, %c0_90, %c17, %c0_91], %95 {strides = array<i32>} : memref<1x8x32x32xf32, #tpu.memory_space<vmem>>, vector<1x8x1x32xf32>,
    %96 = vector.extract_strided_slice %14 {offsets = [0, 144], sizes = [8, 16], strides = [1, 1]} : vector<8x256xf32> to vector<8x16xf32>
    %c0_92 = arith.constant 0 : index
    %c0_93 = arith.constant 0 : index
    %97 = vector.load %arg6[%c0_92, %c0_93] : memref<16x32xf32, #tpu.memory_space<vmem>>, vector<16x32xf32>
    %cst_94 = arith.constant dense<0.000000e+00> : vector<8x32xf32>
    %98 = tpu.matmul %96, %97, %cst_94 {dimension_numbers = #tpu.dot_dimension_numbers<[1], [0], [0], [1], [0, 0, 1, 1], [], []>} : vector<8x16xf32>, vector<16x32xf32>, vector<8x32xf32> -> vector<8x32xf32>
    %c0_95 = arith.constant 0 : index
    %c0_96 = arith.constant 0 : index
    %c18 = arith.constant 18 : index
    %c0_97 = arith.constant 0 : index
    %99 = vector.load %arg7[%c0_95, %c0_96, %c18, %c0_97] : memref<1x8x32x32xf32, #tpu.memory_space<vmem>>, vector<1x8x1x32xf32>
    %100 = vector.shape_cast %99 : vector<1x8x1x32xf32> to vector<8x32xf32>
    %101 = vector.shape_cast %98 : vector<8x32xf32> to vector<1x8x1x32xf32>
    tpu.vector_store %arg7[%c0_95, %c0_96, %c18, %c0_97], %101 {strides = array<i32>} : memref<1x8x32x32xf32, #tpu.memory_space<vmem>>, vector<1x8x1x32xf32>,
    %c0_98 = arith.constant 0 : index
    %c0_99 = arith.constant 0 : index
    %c19 = arith.constant 19 : index
    %c0_100 = arith.constant 0 : index
    %102 = vector.load %arg7[%c0_98, %c0_99, %c19, %c0_100] : memref<1x8x32x32xf32, #tpu.memory_space<vmem>>, vector<1x8x1x32xf32>
    %103 = vector.shape_cast %102 : vector<1x8x1x32xf32> to vector<8x32xf32>
    %104 = vector.shape_cast %98 : vector<8x32xf32> to vector<1x8x1x32xf32>
    tpu.vector_store %arg7[%c0_98, %c0_99, %c19, %c0_100], %104 {strides = array<i32>} : memref<1x8x32x32xf32, #tpu.memory_space<vmem>>, vector<1x8x1x32xf32>,
    %105 = vector.extract_strided_slice %14 {offsets = [0, 160], sizes = [8, 16], strides = [1, 1]} : vector<8x256xf32> to vector<8x16xf32>
    %c0_101 = arith.constant 0 : index
    %c0_102 = arith.constant 0 : index
    %106 = vector.load %arg6[%c0_101, %c0_102] : memref<16x32xf32, #tpu.memory_space<vmem>>, vector<16x32xf32>
    %cst_103 = arith.constant dense<0.000000e+00> : vector<8x32xf32>
    %107 = tpu.matmul %105, %106, %cst_103 {dimension_numbers = #tpu.dot_dimension_numbers<[1], [0], [0], [1], [0, 0, 1, 1], [], []>} : vector<8x16xf32>, vector<16x32xf32>, vector<8x32xf32> -> vector<8x32xf32>
    %c0_104 = arith.constant 0 : index
    %c0_105 = arith.constant 0 : index
    %c20 = arith.constant 20 : index
    %c0_106 = arith.constant 0 : index
    %108 = vector.load %arg7[%c0_104, %c0_105, %c20, %c0_106] : memref<1x8x32x32xf32, #tpu.memory_space<vmem>>, vector<1x8x1x32xf32>
    %109 = vector.shape_cast %108 : vector<1x8x1x32xf32> to vector<8x32xf32>
    %110 = vector.shape_cast %107 : vector<8x32xf32> to vector<1x8x1x32xf32>
    tpu.vector_store %arg7[%c0_104, %c0_105, %c20, %c0_106], %110 {strides = array<i32>} : memref<1x8x32x32xf32, #tpu.memory_space<vmem>>, vector<1x8x1x32xf32>,
    %c0_107 = arith.constant 0 : index
    %c0_108 = arith.constant 0 : index
    %c21 = arith.constant 21 : index
    %c0_109 = arith.constant 0 : index
    %111 = vector.load %arg7[%c0_107, %c0_108, %c21, %c0_109] : memref<1x8x32x32xf32, #tpu.memory_space<vmem>>, vector<1x8x1x32xf32>
    %112 = vector.shape_cast %111 : vector<1x8x1x32xf32> to vector<8x32xf32>
    %113 = vector.shape_cast %107 : vector<8x32xf32> to vector<1x8x1x32xf32>
    tpu.vector_store %arg7[%c0_107, %c0_108, %c21, %c0_109], %113 {strides = array<i32>} : memref<1x8x32x32xf32, #tpu.memory_space<vmem>>, vector<1x8x1x32xf32>,
    %114 = vector.extract_strided_slice %14 {offsets = [0, 176], sizes = [8, 16], strides = [1, 1]} : vector<8x256xf32> to vector<8x16xf32>
    %c0_110 = arith.constant 0 : index
    %c0_111 = arith.constant 0 : index
    %115 = vector.load %arg6[%c0_110, %c0_111] : memref<16x32xf32, #tpu.memory_space<vmem>>, vector<16x32xf32>
    %cst_112 = arith.constant dense<0.000000e+00> : vector<8x32xf32>
    %116 = tpu.matmul %114, %115, %cst_112 {dimension_numbers = #tpu.dot_dimension_numbers<[1], [0], [0], [1], [0, 0, 1, 1], [], []>} : vector<8x16xf32>, vector<16x32xf32>, vector<8x32xf32> -> vector<8x32xf32>
    %c0_113 = arith.constant 0 : index
    %c0_114 = arith.constant 0 : index
    %c22 = arith.constant 22 : index
    %c0_115 = arith.constant 0 : index
    %117 = vector.load %arg7[%c0_113, %c0_114, %c22, %c0_115] : memref<1x8x32x32xf32, #tpu.memory_space<vmem>>, vector<1x8x1x32xf32>
    %118 = vector.shape_cast %117 : vector<1x8x1x32xf32> to vector<8x32xf32>
    %119 = vector.shape_cast %116 : vector<8x32xf32> to vector<1x8x1x32xf32>
    tpu.vector_store %arg7[%c0_113, %c0_114, %c22, %c0_115], %119 {strides = array<i32>} : memref<1x8x32x32xf32, #tpu.memory_space<vmem>>, vector<1x8x1x32xf32>,
    %c0_116 = arith.constant 0 : index
    %c0_117 = arith.constant 0 : index
    %c23 = arith.constant 23 : index
    %c0_118 = arith.constant 0 : index
    %120 = vector.load %arg7[%c0_116, %c0_117, %c23, %c0_118] : memref<1x8x32x32xf32, #tpu.memory_space<vmem>>, vector<1x8x1x32xf32>
    %121 = vector.shape_cast %120 : vector<1x8x1x32xf32> to vector<8x32xf32>
    %122 = vector.shape_cast %116 : vector<8x32xf32> to vector<1x8x1x32xf32>
    tpu.vector_store %arg7[%c0_116, %c0_117, %c23, %c0_118], %122 {strides = array<i32>} : memref<1x8x32x32xf32, #tpu.memory_space<vmem>>, vector<1x8x1x32xf32>,
    %123 = vector.extract_strided_slice %14 {offsets = [0, 192], sizes = [8, 16], strides = [1, 1]} : vector<8x256xf32> to vector<8x16xf32>
    %c0_119 = arith.constant 0 : index
    %c0_120 = arith.constant 0 : index
    %124 = vector.load %arg6[%c0_119, %c0_120] : memref<16x32xf32, #tpu.memory_space<vmem>>, vector<16x32xf32>
    %cst_121 = arith.constant dense<0.000000e+00> : vector<8x32xf32>
    %125 = tpu.matmul %123, %124, %cst_121 {dimension_numbers = #tpu.dot_dimension_numbers<[1], [0], [0], [1], [0, 0, 1, 1], [], []>} : vector<8x16xf32>, vector<16x32xf32>, vector<8x32xf32> -> vector<8x32xf32>
    %c0_122 = arith.constant 0 : index
    %c0_123 = arith.constant 0 : index
    %c24 = arith.constant 24 : index
    %c0_124 = arith.constant 0 : index
    %126 = vector.load %arg7[%c0_122, %c0_123, %c24, %c0_124] : memref<1x8x32x32xf32, #tpu.memory_space<vmem>>, vector<1x8x1x32xf32>
    %127 = vector.shape_cast %126 : vector<1x8x1x32xf32> to vector<8x32xf32>
    %128 = vector.shape_cast %125 : vector<8x32xf32> to vector<1x8x1x32xf32>
    tpu.vector_store %arg7[%c0_122, %c0_123, %c24, %c0_124], %128 {strides = array<i32>} : memref<1x8x32x32xf32, #tpu.memory_space<vmem>>, vector<1x8x1x32xf32>,
    %c0_125 = arith.constant 0 : index
    %c0_126 = arith.constant 0 : index
    %c25 = arith.constant 25 : index
    %c0_127 = arith.constant 0 : index
    %129 = vector.load %arg7[%c0_125, %c0_126, %c25, %c0_127] : memref<1x8x32x32xf32, #tpu.memory_space<vmem>>, vector<1x8x1x32xf32>
    %130 = vector.shape_cast %129 : vector<1x8x1x32xf32> to vector<8x32xf32>
    %131 = vector.shape_cast %125 : vector<8x32xf32> to vector<1x8x1x32xf32>
    tpu.vector_store %arg7[%c0_125, %c0_126, %c25, %c0_127], %131 {strides = array<i32>} : memref<1x8x32x32xf32, #tpu.memory_space<vmem>>, vector<1x8x1x32xf32>,
    %132 = vector.extract_strided_slice %14 {offsets = [0, 208], sizes = [8, 16], strides = [1, 1]} : vector<8x256xf32> to vector<8x16xf32>
    %c0_128 = arith.constant 0 : index
    %c0_129 = arith.constant 0 : index
    %133 = vector.load %arg6[%c0_128, %c0_129] : memref<16x32xf32, #tpu.memory_space<vmem>>, vector<16x32xf32>
    %cst_130 = arith.constant dense<0.000000e+00> : vector<8x32xf32>
    %134 = tpu.matmul %132, %133, %cst_130 {dimension_numbers = #tpu.dot_dimension_numbers<[1], [0], [0], [1], [0, 0, 1, 1], [], []>} : vector<8x16xf32>, vector<16x32xf32>, vector<8x32xf32> -> vector<8x32xf32>
    %c0_131 = arith.constant 0 : index
    %c0_132 = arith.constant 0 : index
    %c26 = arith.constant 26 : index
    %c0_133 = arith.constant 0 : index
    %135 = vector.load %arg7[%c0_131, %c0_132, %c26, %c0_133] : memref<1x8x32x32xf32, #tpu.memory_space<vmem>>, vector<1x8x1x32xf32>
    %136 = vector.shape_cast %135 : vector<1x8x1x32xf32> to vector<8x32xf32>
    %137 = vector.shape_cast %134 : vector<8x32xf32> to vector<1x8x1x32xf32>
    tpu.vector_store %arg7[%c0_131, %c0_132, %c26, %c0_133], %137 {strides = array<i32>} : memref<1x8x32x32xf32, #tpu.memory_space<vmem>>, vector<1x8x1x32xf32>,
    %c0_134 = arith.constant 0 : index
    %c0_135 = arith.constant 0 : index
    %c27 = arith.constant 27 : index
    %c0_136 = arith.constant 0 : index
    %138 = vector.load %arg7[%c0_134, %c0_135, %c27, %c0_136] : memref<1x8x32x32xf32, #tpu.memory_space<vmem>>, vector<1x8x1x32xf32>
    %139 = vector.shape_cast %138 : vector<1x8x1x32xf32> to vector<8x32xf32>
    %140 = vector.shape_cast %134 : vector<8x32xf32> to vector<1x8x1x32xf32>
    tpu.vector_store %arg7[%c0_134, %c0_135, %c27, %c0_136], %140 {strides = array<i32>} : memref<1x8x32x32xf32, #tpu.memory_space<vmem>>, vector<1x8x1x32xf32>,
    %141 = vector.extract_strided_slice %14 {offsets = [0, 224], sizes = [8, 16], strides = [1, 1]} : vector<8x256xf32> to vector<8x16xf32>
    %c0_137 = arith.constant 0 : index
    %c0_138 = arith.constant 0 : index
    %142 = vector.load %arg6[%c0_137, %c0_138] : memref<16x32xf32, #tpu.memory_space<vmem>>, vector<16x32xf32>
    %cst_139 = arith.constant dense<0.000000e+00> : vector<8x32xf32>
    %143 = tpu.matmul %141, %142, %cst_139 {dimension_numbers = #tpu.dot_dimension_numbers<[1], [0], [0], [1], [0, 0, 1, 1], [], []>} : vector<8x16xf32>, vector<16x32xf32>, vector<8x32xf32> -> vector<8x32xf32>
    %c0_140 = arith.constant 0 : index
    %c0_141 = arith.constant 0 : index
    %c28 = arith.constant 28 : index
    %c0_142 = arith.constant 0 : index
    %144 = vector.load %arg7[%c0_140, %c0_141, %c28, %c0_142] : memref<1x8x32x32xf32, #tpu.memory_space<vmem>>, vector<1x8x1x32xf32>
    %145 = vector.shape_cast %144 : vector<1x8x1x32xf32> to vector<8x32xf32>
    %146 = vector.shape_cast %143 : vector<8x32xf32> to vector<1x8x1x32xf32>
    tpu.vector_store %arg7[%c0_140, %c0_141, %c28, %c0_142], %146 {strides = array<i32>} : memref<1x8x32x32xf32, #tpu.memory_space<vmem>>, vector<1x8x1x32xf32>,
    %c0_143 = arith.constant 0 : index
    %c0_144 = arith.constant 0 : index
    %c29 = arith.constant 29 : index
    %c0_145 = arith.constant 0 : index
    %147 = vector.load %arg7[%c0_143, %c0_144, %c29, %c0_145] : memref<1x8x32x32xf32, #tpu.memory_space<vmem>>, vector<1x8x1x32xf32>
    %148 = vector.shape_cast %147 : vector<1x8x1x32xf32> to vector<8x32xf32>
    %149 = vector.shape_cast %143 : vector<8x32xf32> to vector<1x8x1x32xf32>
    tpu.vector_store %arg7[%c0_143, %c0_144, %c29, %c0_145], %149 {strides = array<i32>} : memref<1x8x32x32xf32, #tpu.memory_space<vmem>>, vector<1x8x1x32xf32>,
    %150 = vector.extract_strided_slice %14 {offsets = [0, 240], sizes = [8, 16], strides = [1, 1]} : vector<8x256xf32> to vector<8x16xf32>
    %c0_146 = arith.constant 0 : index
    %c0_147 = arith.constant 0 : index
    %151 = vector.load %arg6[%c0_146, %c0_147] : memref<16x32xf32, #tpu.memory_space<vmem>>, vector<16x32xf32>
    %cst_148 = arith.constant dense<0.000000e+00> : vector<8x32xf32>
    %152 = tpu.matmul %150, %151, %cst_148 {dimension_numbers = #tpu.dot_dimension_numbers<[1], [0], [0], [1], [0, 0, 1, 1], [], []>} : vector<8x16xf32>, vector<16x32xf32>, vector<8x32xf32> -> vector<8x32xf32>
    %c0_149 = arith.constant 0 : index
    %c0_150 = arith.constant 0 : index
    %c30 = arith.constant 30 : index
    %c0_151 = arith.constant 0 : index
    %153 = vector.load %arg7[%c0_149, %c0_150, %c30, %c0_151] : memref<1x8x32x32xf32, #tpu.memory_space<vmem>>, vector<1x8x1x32xf32>
    %154 = vector.shape_cast %153 : vector<1x8x1x32xf32> to vector<8x32xf32>
    %155 = vector.shape_cast %152 : vector<8x32xf32> to vector<1x8x1x32xf32>
    tpu.vector_store %arg7[%c0_149, %c0_150, %c30, %c0_151], %155 {strides = array<i32>} : memref<1x8x32x32xf32, #tpu.memory_space<vmem>>, vector<1x8x1x32xf32>,
    %c0_152 = arith.constant 0 : index
    %c0_153 = arith.constant 0 : index
    %c31 = arith.constant 31 : index
    %c0_154 = arith.constant 0 : index
    %156 = vector.load %arg7[%c0_152, %c0_153, %c31, %c0_154] : memref<1x8x32x32xf32, #tpu.memory_space<vmem>>, vector<1x8x1x32xf32>
    %157 = vector.shape_cast %156 : vector<1x8x1x32xf32> to vector<8x32xf32>
    %158 = vector.shape_cast %152 : vector<8x32xf32> to vector<1x8x1x32xf32>
    tpu.vector_store %arg7[%c0_152, %c0_153, %c31, %c0_154], %158 {strides = array<i32>} : memref<1x8x32x32xf32, #tpu.memory_space<vmem>>, vector<1x8x1x32xf32>,
    return
  }
  func.func @transform_0(%arg0: i32, %arg1: i32) -> (i32, i32, i32) {
    %c0_i32 = arith.constant 0 : i32
    %c0_i32_0 = arith.constant 0 : i32
    return %arg0, %c0_i32, %arg1 : i32, i32, i32
  }
  func.func @transform_1(%arg0: i32, %arg1: i32) -> (i32, i32) {
    %c0_i32 = arith.constant 0 : i32
    %c0_i32_0 = arith.constant 0 : i32
    %c0_i32_1 = arith.constant 0 : i32
    return %c0_i32, %c0_i32_0 : i32, i32
  }
  func.func @transform_2(%arg0: i32, %arg1: i32) -> (i32, i32) {
    %c0_i32 = arith.constant 0 : i32
    %c0_i32_0 = arith.constant 0 : i32
    %c0_i32_1 = arith.constant 0 : i32
    return %c0_i32, %c0_i32_0 : i32, i32
  }
  func.func @transform_3(%arg0: i32, %arg1: i32) -> (i32, i32) {
    %c0_i32 = arith.constant 0 : i32
    %c0_i32_0 = arith.constant 0 : i32
    %c0_i32_1 = arith.constant 0 : i32
    return %c0_i32, %c0_i32_0 : i32, i32
  }
  func.func @transform_4(%arg0: i32, %arg1: i32) -> (i32, i32) {
    %c0_i32 = arith.constant 0 : i32
    %c0_i32_0 = arith.constant 0 : i32
    %c0_i32_1 = arith.constant 0 : i32
    return %c0_i32, %c0_i32_0 : i32, i32
  }
  func.func @transform_5(%arg0: i32, %arg1: i32) -> (i32, i32, i32, i32) {
    %c0_i32 = arith.constant 0 : i32
    %c0_i32_0 = arith.constant 0 : i32
    %c0_i32_1 = arith.constant 0 : i32
    return %arg0, %c0_i32, %arg1, %c0_i32_0 : i32, i32, i32, i32
  }
}

</mosaic_0001>

<llo_original>
// kernel: tpu_custom_call.1
$region0: #{tpu_custom_call.1}
  #allocation0 [shape = 'u32[]', space=smem, size = 0x4, offset = 0x4, fixed_abs, tag = 'smem constant byte address 0x4 - core index']
  #allocation1 [shape = 'u32[72,128]{1,0:T(1,128)}', space=vmem, size = 0x9000, scoped, tag = 'internal scratch']
  %s0 = inlined_call_operand.vmem [shape: f32[2,4,256], index: 0, kind: input, shape index: {}]
  %s1 = inlined_call_operand.vmem [shape: f32[8,4], index: 1, kind: input, shape index: {}]
  %s2 = inlined_call_operand.vmem [shape: f32[8,1], index: 2, kind: input, shape index: {}]
  %s3 = inlined_call_operand.vmem [shape: f32[8,1], index: 3, kind: input, shape index: {}]
  %s4 = inlined_call_operand.vmem [shape: f32[16,32], index: 4, kind: input, shape index: {}]
  %s5 = inlined_call_operand.hbm [shape: f32[2,8,32,32], index: 5, kind: output, shape index: {}]
  %s6 = sld [smem:[#allocation0]]
  $region53: #{tpu_custom_call.1} parent=0
    _
  %s8 = ssub.s32 1, %s6
  %s9 = scalar_select 0, %s8, %s6
  $region1: #{tpu_custom_call.1} parent=0
    #allocation2 [shape = 'u8[262144]{0}', space=vmem, size = 0x40000, scoped, tag = 'output window, operand 0']
    #allocation3 [shape = 's32[2]{0}', space=sflag, size = 0x8, scoped, tag = 'scoped memory for tpu_custom_call.1']
    %10 = vsyncpa [#allocation3], 0
    %s11 = scalar_lea.sflag [#allocation3], 1
    %12 = vsyncpa %s11, 0
    loop: start=0, step=1, limit=4
    $region2: #{tpu_custom_call.1} parent=1 // loop_pre_header
      _
    $region3: #{tpu_custom_call.1} parent=1 // loop_header
      %s14 = sphi 0, %s18
      %p15 = scmp.ge.s32.totalorder %s14, 4
      %s21 = sphi 0, %s33
      %s22 = sphi 0, %s29
      %s23 = sphi 0, %s21
      %s24 = sphi 0, %s22
      %s25 = sphi 0, %s23
      %s26 = sphi 0, %s24
      %s38 = sphi 0, %s40
      %s41 = sphi 0, %s38
      %s42 = sphi 0, %s41
      %s58 = sphi 0, %s42
      %s62 = sphi 0, %s62
      %s64 = sphi 0, %s62
      %s65 = sphi 0, %s64
      %s79 = sphi 0, %s65
      %s83 = sphi 0, %s83
      %s85 = sphi 0, %s83
      %s86 = sphi 0, %s85
      %s100 = sphi 0, %s86
      %s104 = sphi 0, %s104
      %s106 = sphi 0, %s104
      %s107 = sphi 0, %s106
      %s121 = sphi 0, %s107
      %s125 = sphi 0, %s125
      %s127 = sphi 0, %s125
      %s128 = sphi 0, %s127
      %s142 = sphi 0, %s128
      %s150 = sphi 0, %s152
      %s153 = sphi 0, %s150
      %s154 = sphi 0, %s153
      %s170 = sphi 0, %s154
    $region4: #{tpu_custom_call.1} parent=1 // loop_header_branch
      %17 = sbr.rel (%p15) target = $region8
    $region5: #{tpu_custom_call.1} parent=1 // loop_body
      %s19 = ssub.s32 %s14, 1
      %s20 = ssub.s32 %s14, 2
      %s27 = sadd.s32 1, %s22
      %p28 = scmp.ge.s32.totalorder %s27, 1
      %s29 = scalar_select %p28, 0, %s27
      %s30 = sadd.s32 1, %s21
      %s31 = scalar_select %p28, %s30, %s21
      %p32 = scmp.ge.s32.totalorder %s31, 2
      %s33 = scalar_select %p32, 0, %s31
      %s34 = ssub.s32 %s21, %s33
      %s35 = ssub.s32 %s22, %s29
      %s36 = sor.u32 %s34, %s35
      %p37 = scmp.eq.s32.totalorder %s36, 0
      %s39 = sadd.s32 %s38, 1
      %s40 = scalar_select %p37, %s38, %s39
      %p43 = pneg %p37
      %p44 = scmp.eq.s32.totalorder %s14, 1
      %p45 = por %p43, %p44
      %p46 = scmp.ne.s32.totalorder %s38, %s41
      %p47 = scmp.eq.s32.totalorder %s14, 0
      %p48 = por %p46, %p47
      %p49 = scmp.ne.s32.totalorder %s38, %s41
      %p50 = scmp.eq.s32.totalorder %s19, 1
      %p51 = por %p49, %p50
      %p52 = scmp.ne.s32.totalorder %s41, %s42
      %p53 = scmp.eq.s32.totalorder %s19, 0
      %p54 = por %p52, %p53
      %p55 = scmp.ne.s32.totalorder %s41, %s42
      %p56 = scmp.eq.s32.totalorder %s20, 1
      %p57 = por %p55, %p56
      %p59 = scmp.ne.s32.totalorder %s42, %s58
      %p60 = scmp.eq.s32.totalorder %s20, 0
      %p61 = por %p59, %p60
      %s63 = sadd.s32 %s62, 1
      %p66 = scmp.eq.s32.totalorder %s14, 1
      %p67 = scmp.ne.s32.totalorder %s62, %s64
      %p68 = scmp.eq.s32.totalorder %s14, 0
      %p69 = por %p67, %p68
      %p70 = scmp.ne.s32.totalorder %s62, %s64
      %p71 = scmp.eq.s32.totalorder %s19, 1
      %p72 = por %p70, %p71
      %p73 = scmp.ne.s32.totalorder %s64, %s65
      %p74 = scmp.eq.s32.totalorder %s19, 0
      %p75 = por %p73, %p74
      %p76 = scmp.ne.s32.totalorder %s64, %s65
      %p77 = scmp.eq.s32.totalorder %s20, 1
      %p78 = por %p76, %p77
      %p80 = scmp.ne.s32.totalorder %s65, %s79
      %p81 = scmp.eq.s32.totalorder %s20, 0
      %p82 = por %p80, %p81
      %s84 = sadd.s32 %s83, 1
      %p87 = scmp.eq.s32.totalorder %s14, 1
      %p88 = scmp.ne.s32.totalorder %s83, %s85
      %p89 = scmp.eq.s32.totalorder %s14, 0
      %p90 = por %p88, %p89
      %p91 = scmp.ne.s32.totalorder %s83, %s85
      %p92 = scmp.eq.s32.totalorder %s19, 1
      %p93 = por %p91, %p92
      %p94 = scmp.ne.s32.totalorder %s85, %s86
      %p95 = scmp.eq.s32.totalorder %s19, 0
      %p96 = por %p94, %p95
      %p97 = scmp.ne.s32.totalorder %s85, %s86
      %p98 = scmp.eq.s32.totalorder %s20, 1
      %p99 = por %p97, %p98
      %p101 = scmp.ne.s32.totalorder %s86, %s100
      %p102 = scmp.eq.s32.totalorder %s20, 0
      %p103 = por %p101, %p102
      %s105 = sadd.s32 %s104, 1
      %p108 = scmp.eq.s32.totalorder %s14, 1
      %p109 = scmp.ne.s32.totalorder %s104, %s106
      %p110 = scmp.eq.s32.totalorder %s14, 0
      %p111 = por %p109, %p110
      %p112 = scmp.ne.s32.totalorder %s104, %s106
      %p113 = scmp.eq.s32.totalorder %s19, 1
      %p114 = por %p112, %p113
      %p115 = scmp.ne.s32.totalorder %s106, %s107
      %p116 = scmp.eq.s32.totalorder %s19, 0
      %p117 = por %p115, %p116
      %p118 = scmp.ne.s32.totalorder %s106, %s107
      %p119 = scmp.eq.s32.totalorder %s20, 1
      %p120 = por %p118, %p119
      %p122 = scmp.ne.s32.totalorder %s107, %s121
      %p123 = scmp.eq.s32.totalorder %s20, 0
      %p124 = por %p122, %p123
      %s126 = sadd.s32 %s125, 1
      %p129 = scmp.eq.s32.totalorder %s14, 1
      %p130 = scmp.ne.s32.totalorder %s125, %s127
      %p131 = scmp.eq.s32.totalorder %s14, 0
      %p132 = por %p130, %p131
      %p133 = scmp.ne.s32.totalorder %s125, %s127
      %p134 = scmp.eq.s32.totalorder %s19, 1
      %p135 = por %p133, %p134
      %p136 = scmp.ne.s32.totalorder %s127, %s128
      %p137 = scmp.eq.s32.totalorder %s19, 0
      %p138 = por %p136, %p137
      %p139 = scmp.ne.s32.totalorder %s127, %s128
      %p140 = scmp.eq.s32.totalorder %s20, 1
      %p141 = por %p139, %p140
      %p143 = scmp.ne.s32.totalorder %s128, %s142
      %p144 = scmp.eq.s32.totalorder %s20, 0
      %p145 = por %p143, %p144
      %s146 = ssub.s32 %s21, %s33
      %s147 = ssub.s32 %s22, %s29
      %s148 = sor.u32 %s146, %s147
      %p149 = scmp.eq.s32.totalorder %s148, 0
      %s151 = sadd.s32 %s150, 1
      %s152 = scalar_select %p149, %s150, %s151
      %p155 = pneg %p149
      %p156 = scmp.eq.s32.totalorder %s14, 1
      %p157 = por %p155, %p156
      %p158 = scmp.ne.s32.totalorder %s150, %s153
      %p159 = scmp.eq.s32.totalorder %s14, 0
      %p160 = por %p158, %p159
      %p161 = scmp.ne.s32.totalorder %s150, %s153
      %p162 = scmp.eq.s32.totalorder %s19, 1
      %p163 = por %p161, %p162
      %p164 = scmp.ne.s32.totalorder %s153, %s154
      %p165 = scmp.eq.s32.totalorder %s19, 0
      %p166 = por %p164, %p165
      %p167 = scmp.ne.s32.totalorder %s153, %s154
      %p168 = scmp.eq.s32.totalorder %s20, 1
      %p169 = por %p167, %p168
      %p171 = scmp.ne.s32.totalorder %s154, %s170
      %p172 = scmp.eq.s32.totalorder %s20, 0
      %p173 = por %p171, %p172
      %p174 = scmp.le.s32.totalorder 1, %s14
      %p175 = scmp.lt.s32.totalorder %s14, 3
      %p176 = pnand %p174, %p175
      %p177 = pneg %p176
      // Predicated region
      $region9: #{tpu_custom_call.1} parent=5 // pred_check
        _
      $region10: #{tpu_custom_call.1} parent=5 // pred_check_branch
        %179 = sbr.rel (%p176) target = $region12
      $region11: #{tpu_custom_call.1} parent=5 // pred_region
        %s180 = ssub.s32 %s14, 1
        // Predicated region
        $region13: #{tpu_custom_call.1} parent=11 // pred_check
          %p181 = pneg %p75
        $region14: #{tpu_custom_call.1} parent=11 // pred_check_branch
          %183 = sbr.rel (%p181) target = $region16
        $region15: #{tpu_custom_call.1} parent=11 // pred_region
          _
        $region16: #{tpu_custom_call.1} parent=11 // pred_fallthru
          _
        // Predicated region
        $region17: #{tpu_custom_call.1} parent=11 // pred_check
          %p184 = pneg %p96
        $region18: #{tpu_custom_call.1} parent=11 // pred_check_branch
          %186 = sbr.rel (%p184) target = $region20
        $region19: #{tpu_custom_call.1} parent=11 // pred_region
          _
        $region20: #{tpu_custom_call.1} parent=11 // pred_fallthru
          _
        // Predicated region
        $region21: #{tpu_custom_call.1} parent=11 // pred_check
          %p187 = pneg %p117
        $region22: #{tpu_custom_call.1} parent=11 // pred_check_branch
          %189 = sbr.rel (%p187) target = $region24
        $region23: #{tpu_custom_call.1} parent=11 // pred_region
          _
        $region24: #{tpu_custom_call.1} parent=11 // pred_fallthru
          _
        // Predicated region
        $region25: #{tpu_custom_call.1} parent=11 // pred_check
          %p190 = pneg %p138
        $region26: #{tpu_custom_call.1} parent=11 // pred_check_branch
          %192 = sbr.rel (%p190) target = $region28
        $region27: #{tpu_custom_call.1} parent=11 // pred_region
          _
        $region28: #{tpu_custom_call.1} parent=11 // pred_fallthru
          _
      $region12: #{tpu_custom_call.1} parent=5 // pred_fallthru
        _
      %p193 = scmp.lt.s32.totalorder %s14, 2
      // Predicated region
      $region29: #{tpu_custom_call.1} parent=5 // pred_check
        %p194 = pneg %p193
      $region30: #{tpu_custom_call.1} parent=5 // pred_check_branch
        %196 = sbr.rel (%p194) target = $region32
      $region31: #{tpu_custom_call.1} parent=5 // pred_region
        // Predicated region
        $region33: #{tpu_custom_call.1} parent=31 // pred_check
          %p197 = pneg %p48
        $region34: #{tpu_custom_call.1} parent=31 // pred_check_branch
          %199 = sbr.rel (%p197) target = $region36
        $region35: #{tpu_custom_call.1} parent=31 // pred_region
          %s200 = smul.u32 2, %s22
          %p201 = scmp.lt.s32.totalorder %s21, 1
          %s202 = scalar_select %p201, %s21, 1
          %p203 = scmp.lt.s32.totalorder %s200, 1
          %s204 = scalar_select %p203, %s200, 1
          %s205 = smul.addr %s202, 2
          %s206 = sadd.s32 %s204, %s205
          %s207 = smul.addr %s206, 4
          %s208 = scalar_lea.vmem %s0, %s207
          %s209 = smul.u32 2, %s22
        $region36: #{tpu_custom_call.1} parent=31 // pred_fallthru
          _
      $region32: #{tpu_custom_call.1} parent=5 // pred_fallthru
        _
      %p210 = scmp.le.s32.totalorder 1, %s14
      %p211 = scmp.lt.s32.totalorder %s14, 3
      %p212 = pnand %p210, %p211
      %p213 = pneg %p212
      // Predicated region
      $region37: #{tpu_custom_call.1} parent=5 // pred_check
        _
      $region38: #{tpu_custom_call.1} parent=5 // pred_check_branch
        %215 = sbr.rel (%p212) target = $region40
      $region39: #{tpu_custom_call.1} parent=5 // pred_region
        %s216 = ssub.s32 %s14, 1
        %s217 = smul.u32 2, %s24
        %p218 = scmp.lt.s32.totalorder %s23, 1
        %s219 = scalar_select %p218, %s23, 1
        %p220 = scmp.lt.s32.totalorder %s217, 1
        %s221 = scalar_select %p220, %s217, 1
        %s222 = smul.addr %s219, 2
        %s223 = sadd.s32 %s221, %s222
        %s224 = smul.addr %s223, 4
        %s225 = scalar_lea.vmem %s0, %s224
        %p226 = pneg %p54
        %p227 = pneg %p51
        %p228 = pneg %p75
        %p229 = pneg %p72
        %p230 = pneg %p96
        %p231 = pneg %p93
        %p232 = pneg %p117
        %p233 = pneg %p114
        %p234 = pneg %p138
        %p235 = pneg %p135
        %p236 = pneg %p166
        %p237 = pneg %p163
        %s238 = sand.u32 %s153, 1
        %s239 = scalar_lea.sflag [#allocation3], %s238
        %s240 = sand.u32 %s153, 1
        %s241 = smul.addr %s240, 256
        %s242 = scalar_lea.vmem [#allocation2], %s241
        %s243 = smul.u32 2, %s24
        %p244 = scmp.lt.s32.totalorder %s23, 1
        %s245 = scalar_select %p244, %s23, 1
        %p246 = scmp.lt.s32.totalorder %s243, 1
        %s247 = scalar_select %p246, %s243, 1
        %s248 = smul.addr %s245, 2
        %s249 = sadd.s32 %s247, %s248
        %s250 = smul.addr %s249, 4
        %s251 = scalar_lea.vmem %s0, %s250
        %s252 = smul.u32 2, %s24
        %s253 = smul.u32 4, %s24
        %v254 = vld [vmem:[%s251] sm:$0xff]
        %v255 = vld [vmem:[%s1] sm:$0xff]
        %257 = vst [vmem:[#allocation1] ss:$2 sm:$0xff] %v254
        %v258 = vld.sshfl [vmem:[#allocation1] sm:$0xff pattern:$0x75316420]
        %v259 = vld.sshfl [vmem:[#allocation1 + $0x8] sm:$0xff pattern:$0x75316420]
        %vm260 = vcmask 31744
        %v262 = vsel %vm260, %v255, 0
        %vm264 = vcmask 1043456
        %v265 = vsel %vm264, %v258, 0
        %v267 = vsel %vm264, %v259, 0
        %269 = vmatpush.msra.mxu0 0.0
        %270 = vmatpush.msra.mxu0 0.0
        %271 = vmatpush.msra.mxu0 0.0
        %272 = vmatpush.msra.mxu0 0.0
        %273 = vmatpush.msra.mxu0 0.0
        %274 = vmatpush.msra.mxu0 0.0
        %275 = vmatpush.msra.mxu0 0.0
        %276 = vmatpush.msra.mxu0 0.0
        %277 = vmatpush.msra.mxu0 0.0
        %278 = vmatpush.msra.mxu0 0.0
        %279 = vmatpush.msra.mxu0 0.0
        %280 = vmatpush.msra.mxu0 0.0
        %281 = vmatpush.msra.mxu0 0.0
        %282 = vmatpush.msra.mxu0 0.0
        %283 = vmatpush.msra.mxu0 0.0
        %284 = vmatpush.msra.mxu0 %v265
        %285 = vmatmul.f32.gmra.mxu0 %v262
        %v286 = vpop.f32.mrf.mxu0
        %v287 = vadd.f32 0.0, %v286
        %288 = vdwg.mxu0
        %289 = vmatpush.msra.mxu0 0.0
        %290 = vmatpush.msra.mxu0 0.0
        %291 = vmatpush.msra.mxu0 0.0
        %292 = vmatpush.msra.mxu0 0.0
        %293 = vmatpush.msra.mxu0 0.0
        %294 = vmatpush.msra.mxu0 0.0
        %295 = vmatpush.msra.mxu0 0.0
        %296 = vmatpush.msra.mxu0 0.0
        %297 = vmatpush.msra.mxu0 0.0
        %298 = vmatpush.msra.mxu0 0.0
        %299 = vmatpush.msra.mxu0 0.0
        %300 = vmatpush.msra.mxu0 0.0
        %301 = vmatpush.msra.mxu0 0.0
        %302 = vmatpush.msra.mxu0 0.0
        %303 = vmatpush.msra.mxu0 0.0
        %304 = vmatpush.msra.mxu0 %v267
        %305 = vmatmul.f32.gmra.mxu0 %v262
        %v306 = vpop.f32.mrf.mxu0
        %v307 = vadd.f32 0.0, %v306
        %308 = vdwg.mxu0
        %v309 = vld [vmem:[%s2] sm:$0xff]
        %311 = vset.pattern.permute.xlu0 0
        %312 = vperm.xlu0 %311, %v309
        %v313 = vpop.permute.xlu0 %312
        %v315 = vmul.f32 %v287, %v313
        %v316 = vmul.f32 %v307, %v313
        %v317 = vld [vmem:[%s3] sm:$0xff]
        %319 = vset.pattern.permute.xlu0 0
        %320 = vperm.xlu0 %319, %v317
        %v321 = vpop.permute.xlu0 %320
        %v323 = vadd.f32 %v315, %v321
        %v324 = vadd.f32 %v316, %v321
        %vm325 = vcmp.gt.f32.partialorder %v323, 0.0
        %vm326 = vcmp.gt.f32.partialorder %v324, 0.0
        %v327 = vmul.f32 %v323, 0.1
        %v328 = vmul.f32 %v324, 0.1
        %v329 = vsel %vm325, %v323, %v327
        %v330 = vsel %vm326, %v324, %v328
        %v331 = vld [vmem:[%s4] sm:$0xff]
        %v332 = vld [vmem:[%s4 + $0x8] sm:$0xff]
        %vm333 = vcmask 130048
        %v335 = vsel %vm333, %v329, 0
        %337 = vmatpush.msra.mxu0 0.0
        %338 = vmatpush.msra.mxu0 0.0
        %339 = vmatpush.msra.mxu0 0.0
        %340 = vmatpush.msra.mxu0 0.0
        %341 = vmatpush.msra.mxu0 0.0
        %342 = vmatpush.msra.mxu0 0.0
        %343 = vmatpush.msra.mxu0 0.0
        %344 = vmatpush.msra.mxu0 0.0
        %345 = vmatpush.msra.mxu0 0.0
        %346 = vmatpush.msra.mxu0 0.0
        %347 = vmatpush.msra.mxu0 0.0
        %348 = vmatpush.msra.mxu0 0.0
        %349 = vmatpush.msra.mxu0 0.0
        %350 = vmatpush.msra.mxu0 0.0
        %351 = vmatpush.msra.mxu0 %v332
        %352 = vmatpush.msra.mxu0 %v331
        %353 = vmatmul.f32.gmra.mxu0 %v335
        %v354 = vpop.f32.mrf.mxu0
        %v355 = vadd.f32 0.0, %v354
        %356 = vdwg.mxu0
        %v358 = vrot.slane %v355, 1
        %v359 = vrot.slane %v355, 2
        %v360 = vrot.slane %v355, 3
        %v361 = vrot.slane %v355, 4
        %v362 = vrot.slane %v355, 5
        %v363 = vrot.slane %v355, 6
        %v364 = vrot.slane %v355, 7
        %vm372 = vcmask 253952
        %373 = vst.msk [vmem:[%s242] sm:$0x1] %vm372, %v355
        %374 = vst.msk [vmem:[%s242 + $0x20] sm:$0x1] %vm372, %v358
        %375 = vst.msk [vmem:[%s242 + $0x40] sm:$0x1] %vm372, %v359
        %376 = vst.msk [vmem:[%s242 + $0x60] sm:$0x1] %vm372, %v360
        %377 = vst.msk [vmem:[%s242 + $0x80] sm:$0x1] %vm372, %v361
        %378 = vst.msk [vmem:[%s242 + $0xa0] sm:$0x1] %vm372, %v362
        %379 = vst.msk [vmem:[%s242 + $0xc0] sm:$0x1] %vm372, %v363
        %380 = vst.msk [vmem:[%s242 + $0xe0] sm:$0x1] %vm372, %v364
        %381 = vst.msk [vmem:[%s242 + $0x1] sm:$0x1] %vm372, %v355
        %382 = vst.msk [vmem:[%s242 + $0x21] sm:$0x1] %vm372, %v358
        %383 = vst.msk [vmem:[%s242 + $0x41] sm:$0x1] %vm372, %v359
        %384 = vst.msk [vmem:[%s242 + $0x61] sm:$0x1] %vm372, %v360
        %385 = vst.msk [vmem:[%s242 + $0x81] sm:$0x1] %vm372, %v361
        %386 = vst.msk [vmem:[%s242 + $0xa1] sm:$0x1] %vm372, %v362
        %387 = vst.msk [vmem:[%s242 + $0xc1] sm:$0x1] %vm372, %v363
        %388 = vst.msk [vmem:[%s242 + $0xe1] sm:$0x1] %vm372, %v364
        %v389 = vld [vmem:[%s4] sm:$0xff]
        %v390 = vld [vmem:[%s4 + $0x8] sm:$0xff]
        %391 = vrot.lane.b32.xlu0 %v329, 112
        %v392 = vpop.permute.xlu0 %391
        %v393 = vsel %vm333, %v392, 0
        %395 = vmatpush.msra.mxu0 0.0
        %396 = vmatpush.msra.mxu0 0.0
        %397 = vmatpush.msra.mxu0 0.0
        %398 = vmatpush.msra.mxu0 0.0
        %399 = vmatpush.msra.mxu0 0.0
        %400 = vmatpush.msra.mxu0 0.0
        %401 = vmatpush.msra.mxu0 0.0
        %402 = vmatpush.msra.mxu0 0.0
        %403 = vmatpush.msra.mxu0 0.0
        %404 = vmatpush.msra.mxu0 0.0
        %405 = vmatpush.msra.mxu0 0.0
        %406 = vmatpush.msra.mxu0 0.0
        %407 = vmatpush.msra.mxu0 0.0
        %408 = vmatpush.msra.mxu0 0.0
        %409 = vmatpush.msra.mxu0 %v390
        %410 = vmatpush.msra.mxu0 %v389
        %411 = vmatmul.f32.gmra.mxu0 %v393
        %v412 = vpop.f32.mrf.mxu0
        %v413 = vadd.f32 0.0, %v412
        %414 = vdwg.mxu0
        %v416 = vrot.slane %v413, 1
        %v417 = vrot.slane %v413, 2
        %v418 = vrot.slane %v413, 3
        %v419 = vrot.slane %v413, 4
        %v420 = vrot.slane %v413, 5
        %v421 = vrot.slane %v413, 6
        %v422 = vrot.slane %v413, 7
        %430 = vst.msk [vmem:[%s242 + $0x2] sm:$0x1] %vm372, %v413
        %431 = vst.msk [vmem:[%s242 + $0x22] sm:$0x1] %vm372, %v416
        %432 = vst.msk [vmem:[%s242 + $0x42] sm:$0x1] %vm372, %v417
        %433 = vst.msk [vmem:[%s242 + $0x62] sm:$0x1] %vm372, %v418
        %434 = vst.msk [vmem:[%s242 + $0x82] sm:$0x1] %vm372, %v419
        %435 = vst.msk [vmem:[%s242 + $0xa2] sm:$0x1] %vm372, %v420
        %436 = vst.msk [vmem:[%s242 + $0xc2] sm:$0x1] %vm372, %v421
        %437 = vst.msk [vmem:[%s242 + $0xe2] sm:$0x1] %vm372, %v422
        %438 = vst.msk [vmem:[%s242 + $0x3] sm:$0x1] %vm372, %v413
        %439 = vst.msk [vmem:[%s242 + $0x23] sm:$0x1] %vm372, %v416
        %440 = vst.msk [vmem:[%s242 + $0x43] sm:$0x1] %vm372, %v417
        %441 = vst.msk [vmem:[%s242 + $0x63] sm:$0x1] %vm372, %v418
        %442 = vst.msk [vmem:[%s242 + $0x83] sm:$0x1] %vm372, %v419
        %443 = vst.msk [vmem:[%s242 + $0xa3] sm:$0x1] %vm372, %v420
        %444 = vst.msk [vmem:[%s242 + $0xc3] sm:$0x1] %vm372, %v421
        %445 = vst.msk [vmem:[%s242 + $0xe3] sm:$0x1] %vm372, %v422
        %v446 = vld [vmem:[%s4] sm:$0xff]
        %v447 = vld [vmem:[%s4 + $0x8] sm:$0xff]
        %448 = vrot.lane.b32.xlu0 %v329, 96
        %v449 = vpop.permute.xlu0 %448
        %v450 = vsel %vm333, %v449, 0
        %452 = vmatpush.msra.mxu0 0.0
        %453 = vmatpush.msra.mxu0 0.0
        %454 = vmatpush.msra.mxu0 0.0
        %455 = vmatpush.msra.mxu0 0.0
        %456 = vmatpush.msra.mxu0 0.0
        %457 = vmatpush.msra.mxu0 0.0
        %458 = vmatpush.msra.mxu0 0.0
        %459 = vmatpush.msra.mxu0 0.0
        %460 = vmatpush.msra.mxu0 0.0
        %461 = vmatpush.msra.mxu0 0.0
        %462 = vmatpush.msra.mxu0 0.0
        %463 = vmatpush.msra.mxu0 0.0
        %464 = vmatpush.msra.mxu0 0.0
        %465 = vmatpush.msra.mxu0 0.0
        %466 = vmatpush.msra.mxu0 %v447
        %467 = vmatpush.msra.mxu0 %v446
        %468 = vmatmul.f32.gmra.mxu0 %v450
        %v469 = vpop.f32.mrf.mxu0
        %v470 = vadd.f32 0.0, %v469
        %471 = vdwg.mxu0
        %v473 = vrot.slane %v470, 1
        %v474 = vrot.slane %v470, 2
        %v475 = vrot.slane %v470, 3
        %v476 = vrot.slane %v470, 4
        %v477 = vrot.slane %v470, 5
        %v478 = vrot.slane %v470, 6
        %v479 = vrot.slane %v470, 7
        %487 = vst.msk [vmem:[%s242 + $0x4] sm:$0x1] %vm372, %v470
        %488 = vst.msk [vmem:[%s242 + $0x24] sm:$0x1] %vm372, %v473
        %489 = vst.msk [vmem:[%s242 + $0x44] sm:$0x1] %vm372, %v474
        %490 = vst.msk [vmem:[%s242 + $0x64] sm:$0x1] %vm372, %v475
        %491 = vst.msk [vmem:[%s242 + $0x84] sm:$0x1] %vm372, %v476
        %492 = vst.msk [vmem:[%s242 + $0xa4] sm:$0x1] %vm372, %v477
        %493 = vst.msk [vmem:[%s242 + $0xc4] sm:$0x1] %vm372, %v478
        %494 = vst.msk [vmem:[%s242 + $0xe4] sm:$0x1] %vm372, %v479
        %495 = vst.msk [vmem:[%s242 + $0x5] sm:$0x1] %vm372, %v470
        %496 = vst.msk [vmem:[%s242 + $0x25] sm:$0x1] %vm372, %v473
        %497 = vst.msk [vmem:[%s242 + $0x45] sm:$0x1] %vm372, %v474
        %498 = vst.msk [vmem:[%s242 + $0x65] sm:$0x1] %vm372, %v475
        %499 = vst.msk [vmem:[%s242 + $0x85] sm:$0x1] %vm372, %v476
        %500 = vst.msk [vmem:[%s242 + $0xa5] sm:$0x1] %vm372, %v477
        %501 = vst.msk [vmem:[%s242 + $0xc5] sm:$0x1] %vm372, %v478
        %502 = vst.msk [vmem:[%s242 + $0xe5] sm:$0x1] %vm372, %v479
        %v503 = vld [vmem:[%s4] sm:$0xff]
        %v504 = vld [vmem:[%s4 + $0x8] sm:$0xff]
        %505 = vrot.lane.b32.xlu0 %v329, 80
        %v506 = vpop.permute.xlu0 %505
        %v507 = vsel %vm333, %v506, 0
        %509 = vmatpush.msra.mxu0 0.0
        %510 = vmatpush.msra.mxu0 0.0
        %511 = vmatpush.msra.mxu0 0.0
        %512 = vmatpush.msra.mxu0 0.0
        %513 = vmatpush.msra.mxu0 0.0
        %514 = vmatpush.msra.mxu0 0.0
        %515 = vmatpush.msra.mxu0 0.0
        %516 = vmatpush.msra.mxu0 0.0
        %517 = vmatpush.msra.mxu0 0.0
        %518 = vmatpush.msra.mxu0 0.0
        %519 = vmatpush.msra.mxu0 0.0
        %520 = vmatpush.msra.mxu0 0.0
        %521 = vmatpush.msra.mxu0 0.0
        %522 = vmatpush.msra.mxu0 0.0
        %523 = vmatpush.msra.mxu0 %v504
        %524 = vmatpush.msra.mxu0 %v503
        %525 = vmatmul.f32.gmra.mxu0 %v507
        %v526 = vpop.f32.mrf.mxu0
        %v527 = vadd.f32 0.0, %v526
        %528 = vdwg.mxu0
        %v530 = vrot.slane %v527, 1
        %v531 = vrot.slane %v527, 2
        %v532 = vrot.slane %v527, 3
        %v533 = vrot.slane %v527, 4
        %v534 = vrot.slane %v527, 5
        %v535 = vrot.slane %v527, 6
        %v536 = vrot.slane %v527, 7
        %544 = vst.msk [vmem:[%s242 + $0x6] sm:$0x1] %vm372, %v527
        %545 = vst.msk [vmem:[%s242 + $0x26] sm:$0x1] %vm372, %v530
        %546 = vst.msk [vmem:[%s242 + $0x46] sm:$0x1] %vm372, %v531
        %547 = vst.msk [vmem:[%s242 + $0x66] sm:$0x1] %vm372, %v532
        %548 = vst.msk [vmem:[%s242 + $0x86] sm:$0x1] %vm372, %v533
        %549 = vst.msk [vmem:[%s242 + $0xa6] sm:$0x1] %vm372, %v534
        %550 = vst.msk [vmem:[%s242 + $0xc6] sm:$0x1] %vm372, %v535
        %551 = vst.msk [vmem:[%s242 + $0xe6] sm:$0x1] %vm372, %v536
        %552 = vst.msk [vmem:[%s242 + $0x7] sm:$0x1] %vm372, %v527
        %553 = vst.msk [vmem:[%s242 + $0x27] sm:$0x1] %vm372, %v530
        %554 = vst.msk [vmem:[%s242 + $0x47] sm:$0x1] %vm372, %v531
        %555 = vst.msk [vmem:[%s242 + $0x67] sm:$0x1] %vm372, %v532
        %556 = vst.msk [vmem:[%s242 + $0x87] sm:$0x1] %vm372, %v533
        %557 = vst.msk [vmem:[%s242 + $0xa7] sm:$0x1] %vm372, %v534
        %558 = vst.msk [vmem:[%s242 + $0xc7] sm:$0x1] %vm372, %v535
        %559 = vst.msk [vmem:[%s242 + $0xe7] sm:$0x1] %vm372, %v536
        %v560 = vld [vmem:[%s4] sm:$0xff]
        %v561 = vld [vmem:[%s4 + $0x8] sm:$0xff]
        %562 = vrot.lane.b32.xlu0 %v329, 64
        %v563 = vpop.permute.xlu0 %562
        %v564 = vsel %vm333, %v563, 0
        %566 = vmatpush.msra.mxu0 0.0
        %567 = vmatpush.msra.mxu0 0.0
        %568 = vmatpush.msra.mxu0 0.0
        %569 = vmatpush.msra.mxu0 0.0
        %570 = vmatpush.msra.mxu0 0.0
        %571 = vmatpush.msra.mxu0 0.0
        %572 = vmatpush.msra.mxu0 0.0
        %573 = vmatpush.msra.mxu0 0.0
        %574 = vmatpush.msra.mxu0 0.0
        %575 = vmatpush.msra.mxu0 0.0
        %576 = vmatpush.msra.mxu0 0.0
        %577 = vmatpush.msra.mxu0 0.0
        %578 = vmatpush.msra.mxu0 0.0
        %579 = vmatpush.msra.mxu0 0.0
        %580 = vmatpush.msra.mxu0 %v561
        %581 = vmatpush.msra.mxu0 %v560
        %582 = vmatmul.f32.gmra.mxu0 %v564
        %v583 = vpop.f32.mrf.mxu0
        %v584 = vadd.f32 0.0, %v583
        %585 = vdwg.mxu0
        %v587 = vrot.slane %v584, 1
        %v588 = vrot.slane %v584, 2
        %v589 = vrot.slane %v584, 3
        %v590 = vrot.slane %v584, 4
        %v591 = vrot.slane %v584, 5
        %v592 = vrot.slane %v584, 6
        %v593 = vrot.slane %v584, 7
        %601 = vst.msk [vmem:[%s242 + $0x8] sm:$0x1] %vm372, %v584
        %602 = vst.msk [vmem:[%s242 + $0x28] sm:$0x1] %vm372, %v587
        %603 = vst.msk [vmem:[%s242 + $0x48] sm:$0x1] %vm372, %v588
        %604 = vst.msk [vmem:[%s242 + $0x68] sm:$0x1] %vm372, %v589
        %605 = vst.msk [vmem:[%s242 + $0x88] sm:$0x1] %vm372, %v590
        %606 = vst.msk [vmem:[%s242 + $0xa8] sm:$0x1] %vm372, %v591
        %607 = vst.msk [vmem:[%s242 + $0xc8] sm:$0x1] %vm372, %v592
        %608 = vst.msk [vmem:[%s242 + $0xe8] sm:$0x1] %vm372, %v593
        %609 = vst.msk [vmem:[%s242 + $0x9] sm:$0x1] %vm372, %v584
        %610 = vst.msk [vmem:[%s242 + $0x29] sm:$0x1] %vm372, %v587
        %611 = vst.msk [vmem:[%s242 + $0x49] sm:$0x1] %vm372, %v588
        %612 = vst.msk [vmem:[%s242 + $0x69] sm:$0x1] %vm372, %v589
        %613 = vst.msk [vmem:[%s242 + $0x89] sm:$0x1] %vm372, %v590
        %614 = vst.msk [vmem:[%s242 + $0xa9] sm:$0x1] %vm372, %v591
        %615 = vst.msk [vmem:[%s242 + $0xc9] sm:$0x1] %vm372, %v592
        %616 = vst.msk [vmem:[%s242 + $0xe9] sm:$0x1] %vm372, %v593
        %v617 = vld [vmem:[%s4] sm:$0xff]
        %v618 = vld [vmem:[%s4 + $0x8] sm:$0xff]
        %619 = vrot.lane.b32.xlu0 %v329, 48
        %v620 = vpop.permute.xlu0 %619
        %v621 = vsel %vm333, %v620, 0
        %623 = vmatpush.msra.mxu0 0.0
        %624 = vmatpush.msra.mxu0 0.0
        %625 = vmatpush.msra.mxu0 0.0
        %626 = vmatpush.msra.mxu0 0.0
        %627 = vmatpush.msra.mxu0 0.0
        %628 = vmatpush.msra.mxu0 0.0
        %629 = vmatpush.msra.mxu0 0.0
        %630 = vmatpush.msra.mxu0 0.0
        %631 = vmatpush.msra.mxu0 0.0
        %632 = vmatpush.msra.mxu0 0.0
        %633 = vmatpush.msra.mxu0 0.0
        %634 = vmatpush.msra.mxu0 0.0
        %635 = vmatpush.msra.mxu0 0.0
        %636 = vmatpush.msra.mxu0 0.0
        %637 = vmatpush.msra.mxu0 %v618
        %638 = vmatpush.msra.mxu0 %v617
        %639 = vmatmul.f32.gmra.mxu0 %v621
        %v640 = vpop.f32.mrf.mxu0
        %v641 = vadd.f32 0.0, %v640
        %642 = vdwg.mxu0
        %v644 = vrot.slane %v641, 1
        %v645 = vrot.slane %v641, 2
        %v646 = vrot.slane %v641, 3
        %v647 = vrot.slane %v641, 4
        %v648 = vrot.slane %v641, 5
        %v649 = vrot.slane %v641, 6
        %v650 = vrot.slane %v641, 7
        %658 = vst.msk [vmem:[%s242 + $0xa] sm:$0x1] %vm372, %v641
        %659 = vst.msk [vmem:[%s242 + $0x2a] sm:$0x1] %vm372, %v644
        %660 = vst.msk [vmem:[%s242 + $0x4a] sm:$0x1] %vm372, %v645
        %661 = vst.msk [vmem:[%s242 + $0x6a] sm:$0x1] %vm372, %v646
        %662 = vst.msk [vmem:[%s242 + $0x8a] sm:$0x1] %vm372, %v647
        %663 = vst.msk [vmem:[%s242 + $0xaa] sm:$0x1] %vm372, %v648
        %664 = vst.msk [vmem:[%s242 + $0xca] sm:$0x1] %vm372, %v649
        %665 = vst.msk [vmem:[%s242 + $0xea] sm:$0x1] %vm372, %v650
        %666 = vst.msk [vmem:[%s242 + $0xb] sm:$0x1] %vm372, %v641
        %667 = vst.msk [vmem:[%s242 + $0x2b] sm:$0x1] %vm372, %v644
        %668 = vst.msk [vmem:[%s242 + $0x4b] sm:$0x1] %vm372, %v645
        %669 = vst.msk [vmem:[%s242 + $0x6b] sm:$0x1] %vm372, %v646
        %670 = vst.msk [vmem:[%s242 + $0x8b] sm:$0x1] %vm372, %v647
        %671 = vst.msk [vmem:[%s242 + $0xab] sm:$0x1] %vm372, %v648
        %672 = vst.msk [vmem:[%s242 + $0xcb] sm:$0x1] %vm372, %v649
        %673 = vst.msk [vmem:[%s242 + $0xeb] sm:$0x1] %vm372, %v650
        %v674 = vld [vmem:[%s4] sm:$0xff]
        %v675 = vld [vmem:[%s4 + $0x8] sm:$0xff]
        %676 = vrot.lane.b32.xlu0 %v329, 32
        %v677 = vpop.permute.xlu0 %676
        %v678 = vsel %vm333, %v677, 0
        %680 = vmatpush.msra.mxu0 0.0
        %681 = vmatpush.msra.mxu0 0.0
        %682 = vmatpush.msra.mxu0 0.0
        %683 = vmatpush.msra.mxu0 0.0
        %684 = vmatpush.msra.mxu0 0.0
        %685 = vmatpush.msra.mxu0 0.0
        %686 = vmatpush.msra.mxu0 0.0
        %687 = vmatpush.msra.mxu0 0.0
        %688 = vmatpush.msra.mxu0 0.0
        %689 = vmatpush.msra.mxu0 0.0
        %690 = vmatpush.msra.mxu0 0.0
        %691 = vmatpush.msra.mxu0 0.0
        %692 = vmatpush.msra.mxu0 0.0
        %693 = vmatpush.msra.mxu0 0.0
        %694 = vmatpush.msra.mxu0 %v675
        %695 = vmatpush.msra.mxu0 %v674
        %696 = vmatmul.f32.gmra.mxu0 %v678
        %v697 = vpop.f32.mrf.mxu0
        %v698 = vadd.f32 0.0, %v697
        %699 = vdwg.mxu0
        %v701 = vrot.slane %v698, 1
        %v702 = vrot.slane %v698, 2
        %v703 = vrot.slane %v698, 3
        %v704 = vrot.slane %v698, 4
        %v705 = vrot.slane %v698, 5
        %v706 = vrot.slane %v698, 6
        %v707 = vrot.slane %v698, 7
        %715 = vst.msk [vmem:[%s242 + $0xc] sm:$0x1] %vm372, %v698
        %716 = vst.msk [vmem:[%s242 + $0x2c] sm:$0x1] %vm372, %v701
        %717 = vst.msk [vmem:[%s242 + $0x4c] sm:$0x1] %vm372, %v702
        %718 = vst.msk [vmem:[%s242 + $0x6c] sm:$0x1] %vm372, %v703
        %719 = vst.msk [vmem:[%s242 + $0x8c] sm:$0x1] %vm372, %v704
        %720 = vst.msk [vmem:[%s242 + $0xac] sm:$0x1] %vm372, %v705
        %721 = vst.msk [vmem:[%s242 + $0xcc] sm:$0x1] %vm372, %v706
        %722 = vst.msk [vmem:[%s242 + $0xec] sm:$0x1] %vm372, %v707
        %723 = vst.msk [vmem:[%s242 + $0xd] sm:$0x1] %vm372, %v698
        %724 = vst.msk [vmem:[%s242 + $0x2d] sm:$0x1] %vm372, %v701
        %725 = vst.msk [vmem:[%s242 + $0x4d] sm:$0x1] %vm372, %v702
        %726 = vst.msk [vmem:[%s242 + $0x6d] sm:$0x1] %vm372, %v703
        %727 = vst.msk [vmem:[%s242 + $0x8d] sm:$0x1] %vm372, %v704
        %728 = vst.msk [vmem:[%s242 + $0xad] sm:$0x1] %vm372, %v705
        %729 = vst.msk [vmem:[%s242 + $0xcd] sm:$0x1] %vm372, %v706
        %730 = vst.msk [vmem:[%s242 + $0xed] sm:$0x1] %vm372, %v707
        %v731 = vld [vmem:[%s4] sm:$0xff]
        %v732 = vld [vmem:[%s4 + $0x8] sm:$0xff]
        %733 = vrot.lane.b32.xlu0 %v329, 16
        %v734 = vpop.permute.xlu0 %733
        %v735 = vsel %vm333, %v734, 0
        %737 = vmatpush.msra.mxu0 0.0
        %738 = vmatpush.msra.mxu0 0.0
        %739 = vmatpush.msra.mxu0 0.0
        %740 = vmatpush.msra.mxu0 0.0
        %741 = vmatpush.msra.mxu0 0.0
        %742 = vmatpush.msra.mxu0 0.0
        %743 = vmatpush.msra.mxu0 0.0
        %744 = vmatpush.msra.mxu0 0.0
        %745 = vmatpush.msra.mxu0 0.0
        %746 = vmatpush.msra.mxu0 0.0
        %747 = vmatpush.msra.mxu0 0.0
        %748 = vmatpush.msra.mxu0 0.0
        %749 = vmatpush.msra.mxu0 0.0
        %750 = vmatpush.msra.mxu0 0.0
        %751 = vmatpush.msra.mxu0 %v732
        %752 = vmatpush.msra.mxu0 %v731
        %753 = vmatmul.f32.gmra.mxu0 %v735
        %v754 = vpop.f32.mrf.mxu0
        %v755 = vadd.f32 0.0, %v754
        %756 = vdwg.mxu0
        %v758 = vrot.slane %v755, 1
        %v759 = vrot.slane %v755, 2
        %v760 = vrot.slane %v755, 3
        %v761 = vrot.slane %v755, 4
        %v762 = vrot.slane %v755, 5
        %v763 = vrot.slane %v755, 6
        %v764 = vrot.slane %v755, 7
        %772 = vst.msk [vmem:[%s242 + $0xe] sm:$0x1] %vm372, %v755
        %773 = vst.msk [vmem:[%s242 + $0x2e] sm:$0x1] %vm372, %v758
        %774 = vst.msk [vmem:[%s242 + $0x4e] sm:$0x1] %vm372, %v759
        %775 = vst.msk [vmem:[%s242 + $0x6e] sm:$0x1] %vm372, %v760
        %776 = vst.msk [vmem:[%s242 + $0x8e] sm:$0x1] %vm372, %v761
        %777 = vst.msk [vmem:[%s242 + $0xae] sm:$0x1] %vm372, %v762
        %778 = vst.msk [vmem:[%s242 + $0xce] sm:$0x1] %vm372, %v763
        %779 = vst.msk [vmem:[%s242 + $0xee] sm:$0x1] %vm372, %v764
        %780 = vst.msk [vmem:[%s242 + $0xf] sm:$0x1] %vm372, %v755
        %781 = vst.msk [vmem:[%s242 + $0x2f] sm:$0x1] %vm372, %v758
        %782 = vst.msk [vmem:[%s242 + $0x4f] sm:$0x1] %vm372, %v759
        %783 = vst.msk [vmem:[%s242 + $0x6f] sm:$0x1] %vm372, %v760
        %784 = vst.msk [vmem:[%s242 + $0x8f] sm:$0x1] %vm372, %v761
        %785 = vst.msk [vmem:[%s242 + $0xaf] sm:$0x1] %vm372, %v762
        %786 = vst.msk [vmem:[%s242 + $0xcf] sm:$0x1] %vm372, %v763
        %787 = vst.msk [vmem:[%s242 + $0xef] sm:$0x1] %vm372, %v764
        %v788 = vld [vmem:[%s4] sm:$0xff]
        %v789 = vld [vmem:[%s4 + $0x8] sm:$0xff]
        %v791 = vsel %vm333, %v330, 0
        %793 = vmatpush.msra.mxu0 0.0
        %794 = vmatpush.msra.mxu0 0.0
        %795 = vmatpush.msra.mxu0 0.0
        %796 = vmatpush.msra.mxu0 0.0
        %797 = vmatpush.msra.mxu0 0.0
        %798 = vmatpush.msra.mxu0 0.0
        %799 = vmatpush.msra.mxu0 0.0
        %800 = vmatpush.msra.mxu0 0.0
        %801 = vmatpush.msra.mxu0 0.0
        %802 = vmatpush.msra.mxu0 0.0
        %803 = vmatpush.msra.mxu0 0.0
        %804 = vmatpush.msra.mxu0 0.0
        %805 = vmatpush.msra.mxu0 0.0
        %806 = vmatpush.msra.mxu0 0.0
        %807 = vmatpush.msra.mxu0 %v789
        %808 = vmatpush.msra.mxu0 %v788
        %809 = vmatmul.f32.gmra.mxu0 %v791
        %v810 = vpop.f32.mrf.mxu0
        %v811 = vadd.f32 0.0, %v810
        %812 = vdwg.mxu0
        %v814 = vrot.slane %v811, 1
        %v815 = vrot.slane %v811, 2
        %v816 = vrot.slane %v811, 3
        %v817 = vrot.slane %v811, 4
        %v818 = vrot.slane %v811, 5
        %v819 = vrot.slane %v811, 6
        %v820 = vrot.slane %v811, 7
        %828 = vst.msk [vmem:[%s242 + $0x10] sm:$0x1] %vm372, %v811
        %829 = vst.msk [vmem:[%s242 + $0x30] sm:$0x1] %vm372, %v814
        %830 = vst.msk [vmem:[%s242 + $0x50] sm:$0x1] %vm372, %v815
        %831 = vst.msk [vmem:[%s242 + $0x70] sm:$0x1] %vm372, %v816
        %832 = vst.msk [vmem:[%s242 + $0x90] sm:$0x1] %vm372, %v817
        %833 = vst.msk [vmem:[%s242 + $0xb0] sm:$0x1] %vm372, %v818
        %834 = vst.msk [vmem:[%s242 + $0xd0] sm:$0x1] %vm372, %v819
        %835 = vst.msk [vmem:[%s242 + $0xf0] sm:$0x1] %vm372, %v820
        %836 = vst.msk [vmem:[%s242 + $0x11] sm:$0x1] %vm372, %v811
        %837 = vst.msk [vmem:[%s242 + $0x31] sm:$0x1] %vm372, %v814
        %838 = vst.msk [vmem:[%s242 + $0x51] sm:$0x1] %vm372, %v815
        %839 = vst.msk [vmem:[%s242 + $0x71] sm:$0x1] %vm372, %v816
        %840 = vst.msk [vmem:[%s242 + $0x91] sm:$0x1] %vm372, %v817
        %841 = vst.msk [vmem:[%s242 + $0xb1] sm:$0x1] %vm372, %v818
        %842 = vst.msk [vmem:[%s242 + $0xd1] sm:$0x1] %vm372, %v819
        %843 = vst.msk [vmem:[%s242 + $0xf1] sm:$0x1] %vm372, %v820
        %v844 = vld [vmem:[%s4] sm:$0xff]
        %v845 = vld [vmem:[%s4 + $0x8] sm:$0xff]
        %846 = vrot.lane.b32.xlu0 %v330, 112
        %v847 = vpop.permute.xlu0 %846
        %v848 = vsel %vm333, %v847, 0
        %850 = vmatpush.msra.mxu0 0.0
        %851 = vmatpush.msra.mxu0 0.0
        %852 = vmatpush.msra.mxu0 0.0
        %853 = vmatpush.msra.mxu0 0.0
        %854 = vmatpush.msra.mxu0 0.0
        %855 = vmatpush.msra.mxu0 0.0
        %856 = vmatpush.msra.mxu0 0.0
        %857 = vmatpush.msra.mxu0 0.0
        %858 = vmatpush.msra.mxu0 0.0
        %859 = vmatpush.msra.mxu0 0.0
        %860 = vmatpush.msra.mxu0 0.0
        %861 = vmatpush.msra.mxu0 0.0
        %862 = vmatpush.msra.mxu0 0.0
        %863 = vmatpush.msra.mxu0 0.0
        %864 = vmatpush.msra.mxu0 %v845
        %865 = vmatpush.msra.mxu0 %v844
        %866 = vmatmul.f32.gmra.mxu0 %v848
        %v867 = vpop.f32.mrf.mxu0
        %v868 = vadd.f32 0.0, %v867
        %869 = vdwg.mxu0
        %v871 = vrot.slane %v868, 1
        %v872 = vrot.slane %v868, 2
        %v873 = vrot.slane %v868, 3
        %v874 = vrot.slane %v868, 4
        %v875 = vrot.slane %v868, 5
        %v876 = vrot.slane %v868, 6
        %v877 = vrot.slane %v868, 7
        %885 = vst.msk [vmem:[%s242 + $0x12] sm:$0x1] %vm372, %v868
        %886 = vst.msk [vmem:[%s242 + $0x32] sm:$0x1] %vm372, %v871
        %887 = vst.msk [vmem:[%s242 + $0x52] sm:$0x1] %vm372, %v872
        %888 = vst.msk [vmem:[%s242 + $0x72] sm:$0x1] %vm372, %v873
        %889 = vst.msk [vmem:[%s242 + $0x92] sm:$0x1] %vm372, %v874
        %890 = vst.msk [vmem:[%s242 + $0xb2] sm:$0x1] %vm372, %v875
        %891 = vst.msk [vmem:[%s242 + $0xd2] sm:$0x1] %vm372, %v876
        %892 = vst.msk [vmem:[%s242 + $0xf2] sm:$0x1] %vm372, %v877
        %893 = vst.msk [vmem:[%s242 + $0x13] sm:$0x1] %vm372, %v868
        %894 = vst.msk [vmem:[%s242 + $0x33] sm:$0x1] %vm372, %v871
        %895 = vst.msk [vmem:[%s242 + $0x53] sm:$0x1] %vm372, %v872
        %896 = vst.msk [vmem:[%s242 + $0x73] sm:$0x1] %vm372, %v873
        %897 = vst.msk [vmem:[%s242 + $0x93] sm:$0x1] %vm372, %v874
        %898 = vst.msk [vmem:[%s242 + $0xb3] sm:$0x1] %vm372, %v875
        %899 = vst.msk [vmem:[%s242 + $0xd3] sm:$0x1] %vm372, %v876
        %900 = vst.msk [vmem:[%s242 + $0xf3] sm:$0x1] %vm372, %v877
        %v901 = vld [vmem:[%s4] sm:$0xff]
        %v902 = vld [vmem:[%s4 + $0x8] sm:$0xff]
        %903 = vrot.lane.b32.xlu0 %v330, 96
        %v904 = vpop.permute.xlu0 %903
        %v905 = vsel %vm333, %v904, 0
        %907 = vmatpush.msra.mxu0 0.0
        %908 = vmatpush.msra.mxu0 0.0
        %909 = vmatpush.msra.mxu0 0.0
        %910 = vmatpush.msra.mxu0 0.0
        %911 = vmatpush.msra.mxu0 0.0
        %912 = vmatpush.msra.mxu0 0.0
        %913 = vmatpush.msra.mxu0 0.0
        %914 = vmatpush.msra.mxu0 0.0
        %915 = vmatpush.msra.mxu0 0.0
        %916 = vmatpush.msra.mxu0 0.0
        %917 = vmatpush.msra.mxu0 0.0
        %918 = vmatpush.msra.mxu0 0.0
        %919 = vmatpush.msra.mxu0 0.0
        %920 = vmatpush.msra.mxu0 0.0
        %921 = vmatpush.msra.mxu0 %v902
        %922 = vmatpush.msra.mxu0 %v901
        %923 = vmatmul.f32.gmra.mxu0 %v905
        %v924 = vpop.f32.mrf.mxu0
        %v925 = vadd.f32 0.0, %v924
        %926 = vdwg.mxu0
        %v928 = vrot.slane %v925, 1
        %v929 = vrot.slane %v925, 2
        %v930 = vrot.slane %v925, 3
        %v931 = vrot.slane %v925, 4
        %v932 = vrot.slane %v925, 5
        %v933 = vrot.slane %v925, 6
        %v934 = vrot.slane %v925, 7
        %942 = vst.msk [vmem:[%s242 + $0x14] sm:$0x1] %vm372, %v925
        %943 = vst.msk [vmem:[%s242 + $0x34] sm:$0x1] %vm372, %v928
        %944 = vst.msk [vmem:[%s242 + $0x54] sm:$0x1] %vm372, %v929
        %945 = vst.msk [vmem:[%s242 + $0x74] sm:$0x1] %vm372, %v930
        %946 = vst.msk [vmem:[%s242 + $0x94] sm:$0x1] %vm372, %v931
        %947 = vst.msk [vmem:[%s242 + $0xb4] sm:$0x1] %vm372, %v932
        %948 = vst.msk [vmem:[%s242 + $0xd4] sm:$0x1] %vm372, %v933
        %949 = vst.msk [vmem:[%s242 + $0xf4] sm:$0x1] %vm372, %v934
        %950 = vst.msk [vmem:[%s242 + $0x15] sm:$0x1] %vm372, %v925
        %951 = vst.msk [vmem:[%s242 + $0x35] sm:$0x1] %vm372, %v928
        %952 = vst.msk [vmem:[%s242 + $0x55] sm:$0x1] %vm372, %v929
        %953 = vst.msk [vmem:[%s242 + $0x75] sm:$0x1] %vm372, %v930
        %954 = vst.msk [vmem:[%s242 + $0x95] sm:$0x1] %vm372, %v931
        %955 = vst.msk [vmem:[%s242 + $0xb5] sm:$0x1] %vm372, %v932
        %956 = vst.msk [vmem:[%s242 + $0xd5] sm:$0x1] %vm372, %v933
        %957 = vst.msk [vmem:[%s242 + $0xf5] sm:$0x1] %vm372, %v934
        %v958 = vld [vmem:[%s4] sm:$0xff]
        %v959 = vld [vmem:[%s4 + $0x8] sm:$0xff]
        %960 = vrot.lane.b32.xlu0 %v330, 80
        %v961 = vpop.permute.xlu0 %960
        %v962 = vsel %vm333, %v961, 0
        %964 = vmatpush.msra.mxu0 0.0
        %965 = vmatpush.msra.mxu0 0.0
        %966 = vmatpush.msra.mxu0 0.0
        %967 = vmatpush.msra.mxu0 0.0
        %968 = vmatpush.msra.mxu0 0.0
        %969 = vmatpush.msra.mxu0 0.0
        %970 = vmatpush.msra.mxu0 0.0
        %971 = vmatpush.msra.mxu0 0.0
        %972 = vmatpush.msra.mxu0 0.0
        %973 = vmatpush.msra.mxu0 0.0
        %974 = vmatpush.msra.mxu0 0.0
        %975 = vmatpush.msra.mxu0 0.0
        %976 = vmatpush.msra.mxu0 0.0
        %977 = vmatpush.msra.mxu0 0.0
        %978 = vmatpush.msra.mxu0 %v959
        %979 = vmatpush.msra.mxu0 %v958
        %980 = vmatmul.f32.gmra.mxu0 %v962
        %v981 = vpop.f32.mrf.mxu0
        %v982 = vadd.f32 0.0, %v981
        %983 = vdwg.mxu0
        %v985 = vrot.slane %v982, 1
        %v986 = vrot.slane %v982, 2
        %v987 = vrot.slane %v982, 3
        %v988 = vrot.slane %v982, 4
        %v989 = vrot.slane %v982, 5
        %v990 = vrot.slane %v982, 6
        %v991 = vrot.slane %v982, 7
        %999 = vst.msk [vmem:[%s242 + $0x16] sm:$0x1] %vm372, %v982
        %1000 = vst.msk [vmem:[%s242 + $0x36] sm:$0x1] %vm372, %v985
        %1001 = vst.msk [vmem:[%s242 + $0x56] sm:$0x1] %vm372, %v986
        %1002 = vst.msk [vmem:[%s242 + $0x76] sm:$0x1] %vm372, %v987
        %1003 = vst.msk [vmem:[%s242 + $0x96] sm:$0x1] %vm372, %v988
        %1004 = vst.msk [vmem:[%s242 + $0xb6] sm:$0x1] %vm372, %v989
        %1005 = vst.msk [vmem:[%s242 + $0xd6] sm:$0x1] %vm372, %v990
        %1006 = vst.msk [vmem:[%s242 + $0xf6] sm:$0x1] %vm372, %v991
        %1007 = vst.msk [vmem:[%s242 + $0x17] sm:$0x1] %vm372, %v982
        %1008 = vst.msk [vmem:[%s242 + $0x37] sm:$0x1] %vm372, %v985
        %1009 = vst.msk [vmem:[%s242 + $0x57] sm:$0x1] %vm372, %v986
        %1010 = vst.msk [vmem:[%s242 + $0x77] sm:$0x1] %vm372, %v987
        %1011 = vst.msk [vmem:[%s242 + $0x97] sm:$0x1] %vm372, %v988
        %1012 = vst.msk [vmem:[%s242 + $0xb7] sm:$0x1] %vm372, %v989
        %1013 = vst.msk [vmem:[%s242 + $0xd7] sm:$0x1] %vm372, %v990
        %1014 = vst.msk [vmem:[%s242 + $0xf7] sm:$0x1] %vm372, %v991
        %v1015 = vld [vmem:[%s4] sm:$0xff]
        %v1016 = vld [vmem:[%s4 + $0x8] sm:$0xff]
        %1017 = vrot.lane.b32.xlu0 %v330, 64
        %v1018 = vpop.permute.xlu0 %1017
        %v1019 = vsel %vm333, %v1018, 0
        %1021 = vmatpush.msra.mxu0 0.0
        %1022 = vmatpush.msra.mxu0 0.0
        %1023 = vmatpush.msra.mxu0 0.0
        %1024 = vmatpush.msra.mxu0 0.0
        %1025 = vmatpush.msra.mxu0 0.0
        %1026 = vmatpush.msra.mxu0 0.0
        %1027 = vmatpush.msra.mxu0 0.0
        %1028 = vmatpush.msra.mxu0 0.0
        %1029 = vmatpush.msra.mxu0 0.0
        %1030 = vmatpush.msra.mxu0 0.0
        %1031 = vmatpush.msra.mxu0 0.0
        %1032 = vmatpush.msra.mxu0 0.0
        %1033 = vmatpush.msra.mxu0 0.0
        %1034 = vmatpush.msra.mxu0 0.0
        %1035 = vmatpush.msra.mxu0 %v1016
        %1036 = vmatpush.msra.mxu0 %v1015
        %1037 = vmatmul.f32.gmra.mxu0 %v1019
        %v1038 = vpop.f32.mrf.mxu0
        %v1039 = vadd.f32 0.0, %v1038
        %1040 = vdwg.mxu0
        %v1042 = vrot.slane %v1039, 1
        %v1043 = vrot.slane %v1039, 2
        %v1044 = vrot.slane %v1039, 3
        %v1045 = vrot.slane %v1039, 4
        %v1046 = vrot.slane %v1039, 5
        %v1047 = vrot.slane %v1039, 6
        %v1048 = vrot.slane %v1039, 7
        %1056 = vst.msk [vmem:[%s242 + $0x18] sm:$0x1] %vm372, %v1039
        %1057 = vst.msk [vmem:[%s242 + $0x38] sm:$0x1] %vm372, %v1042
        %1058 = vst.msk [vmem:[%s242 + $0x58] sm:$0x1] %vm372, %v1043
        %1059 = vst.msk [vmem:[%s242 + $0x78] sm:$0x1] %vm372, %v1044
        %1060 = vst.msk [vmem:[%s242 + $0x98] sm:$0x1] %vm372, %v1045
        %1061 = vst.msk [vmem:[%s242 + $0xb8] sm:$0x1] %vm372, %v1046
        %1062 = vst.msk [vmem:[%s242 + $0xd8] sm:$0x1] %vm372, %v1047
        %1063 = vst.msk [vmem:[%s242 + $0xf8] sm:$0x1] %vm372, %v1048
        %1064 = vst.msk [vmem:[%s242 + $0x19] sm:$0x1] %vm372, %v1039
        %1065 = vst.msk [vmem:[%s242 + $0x39] sm:$0x1] %vm372, %v1042
        %1066 = vst.msk [vmem:[%s242 + $0x59] sm:$0x1] %vm372, %v1043
        %1067 = vst.msk [vmem:[%s242 + $0x79] sm:$0x1] %vm372, %v1044
        %1068 = vst.msk [vmem:[%s242 + $0x99] sm:$0x1] %vm372, %v1045
        %1069 = vst.msk [vmem:[%s242 + $0xb9] sm:$0x1] %vm372, %v1046
        %1070 = vst.msk [vmem:[%s242 + $0xd9] sm:$0x1] %vm372, %v1047
        %1071 = vst.msk [vmem:[%s242 + $0xf9] sm:$0x1] %vm372, %v1048
        %v1072 = vld [vmem:[%s4] sm:$0xff]
        %v1073 = vld [vmem:[%s4 + $0x8] sm:$0xff]
        %1074 = vrot.lane.b32.xlu0 %v330, 48
        %v1075 = vpop.permute.xlu0 %1074
        %v1076 = vsel %vm333, %v1075, 0
        %1078 = vmatpush.msra.mxu0 0.0
        %1079 = vmatpush.msra.mxu0 0.0
        %1080 = vmatpush.msra.mxu0 0.0
        %1081 = vmatpush.msra.mxu0 0.0
        %1082 = vmatpush.msra.mxu0 0.0
        %1083 = vmatpush.msra.mxu0 0.0
        %1084 = vmatpush.msra.mxu0 0.0
        %1085 = vmatpush.msra.mxu0 0.0
        %1086 = vmatpush.msra.mxu0 0.0
        %1087 = vmatpush.msra.mxu0 0.0
        %1088 = vmatpush.msra.mxu0 0.0
        %1089 = vmatpush.msra.mxu0 0.0
        %1090 = vmatpush.msra.mxu0 0.0
        %1091 = vmatpush.msra.mxu0 0.0
        %1092 = vmatpush.msra.mxu0 %v1073
        %1093 = vmatpush.msra.mxu0 %v1072
        %1094 = vmatmul.f32.gmra.mxu0 %v1076
        %v1095 = vpop.f32.mrf.mxu0
        %v1096 = vadd.f32 0.0, %v1095
        %1097 = vdwg.mxu0
        %v1099 = vrot.slane %v1096, 1
        %v1100 = vrot.slane %v1096, 2
        %v1101 = vrot.slane %v1096, 3
        %v1102 = vrot.slane %v1096, 4
        %v1103 = vrot.slane %v1096, 5
        %v1104 = vrot.slane %v1096, 6
        %v1105 = vrot.slane %v1096, 7
        %1113 = vst.msk [vmem:[%s242 + $0x1a] sm:$0x1] %vm372, %v1096
        %1114 = vst.msk [vmem:[%s242 + $0x3a] sm:$0x1] %vm372, %v1099
        %1115 = vst.msk [vmem:[%s242 + $0x5a] sm:$0x1] %vm372, %v1100
        %1116 = vst.msk [vmem:[%s242 + $0x7a] sm:$0x1] %vm372, %v1101
        %1117 = vst.msk [vmem:[%s242 + $0x9a] sm:$0x1] %vm372, %v1102
        %1118 = vst.msk [vmem:[%s242 + $0xba] sm:$0x1] %vm372, %v1103
        %1119 = vst.msk [vmem:[%s242 + $0xda] sm:$0x1] %vm372, %v1104
        %1120 = vst.msk [vmem:[%s242 + $0xfa] sm:$0x1] %vm372, %v1105
        %1121 = vst.msk [vmem:[%s242 + $0x1b] sm:$0x1] %vm372, %v1096
        %1122 = vst.msk [vmem:[%s242 + $0x3b] sm:$0x1] %vm372, %v1099
        %1123 = vst.msk [vmem:[%s242 + $0x5b] sm:$0x1] %vm372, %v1100
        %1124 = vst.msk [vmem:[%s242 + $0x7b] sm:$0x1] %vm372, %v1101
        %1125 = vst.msk [vmem:[%s242 + $0x9b] sm:$0x1] %vm372, %v1102
        %1126 = vst.msk [vmem:[%s242 + $0xbb] sm:$0x1] %vm372, %v1103
        %1127 = vst.msk [vmem:[%s242 + $0xdb] sm:$0x1] %vm372, %v1104
        %1128 = vst.msk [vmem:[%s242 + $0xfb] sm:$0x1] %vm372, %v1105
        %v1129 = vld [vmem:[%s4] sm:$0xff]
        %v1130 = vld [vmem:[%s4 + $0x8] sm:$0xff]
        %1131 = vrot.lane.b32.xlu0 %v330, 32
        %v1132 = vpop.permute.xlu0 %1131
        %v1133 = vsel %vm333, %v1132, 0
        %1135 = vmatpush.msra.mxu0 0.0
        %1136 = vmatpush.msra.mxu0 0.0
        %1137 = vmatpush.msra.mxu0 0.0
        %1138 = vmatpush.msra.mxu0 0.0
        %1139 = vmatpush.msra.mxu0 0.0
        %1140 = vmatpush.msra.mxu0 0.0
        %1141 = vmatpush.msra.mxu0 0.0
        %1142 = vmatpush.msra.mxu0 0.0
        %1143 = vmatpush.msra.mxu0 0.0
        %1144 = vmatpush.msra.mxu0 0.0
        %1145 = vmatpush.msra.mxu0 0.0
        %1146 = vmatpush.msra.mxu0 0.0
        %1147 = vmatpush.msra.mxu0 0.0
        %1148 = vmatpush.msra.mxu0 0.0
        %1149 = vmatpush.msra.mxu0 %v1130
        %1150 = vmatpush.msra.mxu0 %v1129
        %1151 = vmatmul.f32.gmra.mxu0 %v1133
        %v1152 = vpop.f32.mrf.mxu0
        %v1153 = vadd.f32 0.0, %v1152
        %1154 = vdwg.mxu0
        %v1156 = vrot.slane %v1153, 1
        %v1157 = vrot.slane %v1153, 2
        %v1158 = vrot.slane %v1153, 3
        %v1159 = vrot.slane %v1153, 4
        %v1160 = vrot.slane %v1153, 5
        %v1161 = vrot.slane %v1153, 6
        %v1162 = vrot.slane %v1153, 7
        %1170 = vst.msk [vmem:[%s242 + $0x1c] sm:$0x1] %vm372, %v1153
        %1171 = vst.msk [vmem:[%s242 + $0x3c] sm:$0x1] %vm372, %v1156
        %1172 = vst.msk [vmem:[%s242 + $0x5c] sm:$0x1] %vm372, %v1157
        %1173 = vst.msk [vmem:[%s242 + $0x7c] sm:$0x1] %vm372, %v1158
        %1174 = vst.msk [vmem:[%s242 + $0x9c] sm:$0x1] %vm372, %v1159
        %1175 = vst.msk [vmem:[%s242 + $0xbc] sm:$0x1] %vm372, %v1160
        %1176 = vst.msk [vmem:[%s242 + $0xdc] sm:$0x1] %vm372, %v1161
        %1177 = vst.msk [vmem:[%s242 + $0xfc] sm:$0x1] %vm372, %v1162
        %1178 = vst.msk [vmem:[%s242 + $0x1d] sm:$0x1] %vm372, %v1153
        %1179 = vst.msk [vmem:[%s242 + $0x3d] sm:$0x1] %vm372, %v1156
        %1180 = vst.msk [vmem:[%s242 + $0x5d] sm:$0x1] %vm372, %v1157
        %1181 = vst.msk [vmem:[%s242 + $0x7d] sm:$0x1] %vm372, %v1158
        %1182 = vst.msk [vmem:[%s242 + $0x9d] sm:$0x1] %vm372, %v1159
        %1183 = vst.msk [vmem:[%s242 + $0xbd] sm:$0x1] %vm372, %v1160
        %1184 = vst.msk [vmem:[%s242 + $0xdd] sm:$0x1] %vm372, %v1161
        %1185 = vst.msk [vmem:[%s242 + $0xfd] sm:$0x1] %vm372, %v1162
        %v1186 = vld [vmem:[%s4] sm:$0xff]
        %v1187 = vld [vmem:[%s4 + $0x8] sm:$0xff]
        %1188 = vrot.lane.b32.xlu0 %v330, 16
        %v1189 = vpop.permute.xlu0 %1188
        %v1190 = vsel %vm333, %v1189, 0
        %1192 = vmatpush.msra.mxu0 0.0
        %1193 = vmatpush.msra.mxu0 0.0
        %1194 = vmatpush.msra.mxu0 0.0
        %1195 = vmatpush.msra.mxu0 0.0
        %1196 = vmatpush.msra.mxu0 0.0
        %1197 = vmatpush.msra.mxu0 0.0
        %1198 = vmatpush.msra.mxu0 0.0
        %1199 = vmatpush.msra.mxu0 0.0
        %1200 = vmatpush.msra.mxu0 0.0
        %1201 = vmatpush.msra.mxu0 0.0
        %1202 = vmatpush.msra.mxu0 0.0
        %1203 = vmatpush.msra.mxu0 0.0
        %1204 = vmatpush.msra.mxu0 0.0
        %1205 = vmatpush.msra.mxu0 0.0
        %1206 = vmatpush.msra.mxu0 %v1187
        %1207 = vmatpush.msra.mxu0 %v1186
        %1208 = vmatmul.f32.gmra.mxu0 %v1190
        %v1209 = vpop.f32.mrf.mxu0
        %v1210 = vadd.f32 0.0, %v1209
        %1211 = vdwg.mxu0
        %v1213 = vrot.slane %v1210, 1
        %v1214 = vrot.slane %v1210, 2
        %v1215 = vrot.slane %v1210, 3
        %v1216 = vrot.slane %v1210, 4
        %v1217 = vrot.slane %v1210, 5
        %v1218 = vrot.slane %v1210, 6
        %v1219 = vrot.slane %v1210, 7
        %1227 = vst.msk [vmem:[%s242 + $0x1e] sm:$0x1] %vm372, %v1210
        %1228 = vst.msk [vmem:[%s242 + $0x3e] sm:$0x1] %vm372, %v1213
        %1229 = vst.msk [vmem:[%s242 + $0x5e] sm:$0x1] %vm372, %v1214
        %1230 = vst.msk [vmem:[%s242 + $0x7e] sm:$0x1] %vm372, %v1215
        %1231 = vst.msk [vmem:[%s242 + $0x9e] sm:$0x1] %vm372, %v1216
        %1232 = vst.msk [vmem:[%s242 + $0xbe] sm:$0x1] %vm372, %v1217
        %1233 = vst.msk [vmem:[%s242 + $0xde] sm:$0x1] %vm372, %v1218
        %1234 = vst.msk [vmem:[%s242 + $0xfe] sm:$0x1] %vm372, %v1219
        %1235 = vst.msk [vmem:[%s242 + $0x1f] sm:$0x1] %vm372, %v1210
        %1236 = vst.msk [vmem:[%s242 + $0x3f] sm:$0x1] %vm372, %v1213
        %1237 = vst.msk [vmem:[%s242 + $0x5f] sm:$0x1] %vm372, %v1214
        %1238 = vst.msk [vmem:[%s242 + $0x7f] sm:$0x1] %vm372, %v1215
        %1239 = vst.msk [vmem:[%s242 + $0x9f] sm:$0x1] %vm372, %v1216
        %1240 = vst.msk [vmem:[%s242 + $0xbf] sm:$0x1] %vm372, %v1217
        %1241 = vst.msk [vmem:[%s242 + $0xdf] sm:$0x1] %vm372, %v1218
        %1242 = vst.msk [vmem:[%s242 + $0xff] sm:$0x1] %vm372, %v1219
        %s1243 = sand.u32 %s153, 1
        %s1244 = scalar_lea.sflag [#allocation3], %s1243
        %s1245 = sand.u32 %s153, 1
        %s1246 = smul.addr %s1245, 256
        %s1247 = scalar_lea.vmem [#allocation2], %s1246
        // Predicated region
        $region41: #{tpu_custom_call.1} parent=39 // pred_check
          %p1248 = pneg %p163
        $region42: #{tpu_custom_call.1} parent=39 // pred_check_branch
          %1250 = sbr.rel (%p1248) target = $region44
        $region43: #{tpu_custom_call.1} parent=39 // pred_region
          %s1251 = smul.u32 4, %s24
          %1253 = vsyncadd %s1244, 0
          %s1254 = smul.addr %s23, 32
          %s1255 = sadd.s32 %s1251, %s1254
          %s1256 = smul.addr %s1255, 8
          %s1257 = scalar_lea.hbm %s5, %s1256
          %s1258 = sshll.u32 %s1247, 4
          %s1259 = int_to_ptr.vmem [resolvable:$true] %s1258
          %s1260 = sshll.u32 %s1257, 4
          %s1261 = int_to_ptr.hbm [resolvable:$true] %s1260
          %1266 = dma.vmem_to_hbm [thread:$0]  %s1259, 4096, %s1261, %s1244, 128, 128, 8
        $region44: #{tpu_custom_call.1} parent=39 // pred_fallthru
          _
      $region40: #{tpu_custom_call.1} parent=5 // pred_fallthru
        _
      %p1267 = scmp.le.s32.totalorder 2, %s14
      // Predicated region
      $region45: #{tpu_custom_call.1} parent=5 // pred_check
        %p1268 = pneg %p1267
      $region46: #{tpu_custom_call.1} parent=5 // pred_check_branch
        %1270 = sbr.rel (%p1268) target = $region48
      $region47: #{tpu_custom_call.1} parent=5 // pred_region
        %s1271 = ssub.s32 %s14, 2
        // Predicated region
        $region49: #{tpu_custom_call.1} parent=47 // pred_check
          %p1272 = pneg %p169
        $region50: #{tpu_custom_call.1} parent=47 // pred_check_branch
          %1274 = sbr.rel (%p1272) target = $region52
        $region51: #{tpu_custom_call.1} parent=47 // pred_region
          %s1275 = sand.u32 %s154, 1
          %s1276 = scalar_lea.sflag [#allocation3], %s1275
          %s1277 = sand.u32 %s154, 1
          %s1278 = smul.addr %s1277, 256
          %s1279 = scalar_lea.vmem [#allocation2], %s1278
          %1281 = dma.done %s1276, 4096
        $region52: #{tpu_custom_call.1} parent=47 // pred_fallthru
          _
      $region48: #{tpu_custom_call.1} parent=5 // pred_fallthru
        _
    $region6: #{tpu_custom_call.1} parent=1 // loop_footer
      %s18 = sadd.s32 1, %s14
    $region7: #{tpu_custom_call.1} parent=1 // loop_footer_branch
      %13 = sbr.rel target = $region3
    $region8: #{tpu_custom_call.1} parent=1 // loop_exit
      _
    %1282 = vsyncpa [#allocation3], 1
    %s1283 = scalar_lea.sflag [#allocation3], 1
    %1284 = vsyncpa %s1283, 1

</llo_original>
